<compile_context>
chip_gen: v5e
topology: v5e:2x2
jax: 0.10.0
libtpu: 0.0.40
codegen_flags: <defaults>
</compile_context>

<pallas_src>
import functools

import jax
import jax.numpy as jnp
from jax import lax
from jax.experimental import pallas as pl
from jax.experimental.pallas import tpu as pltpu


# ---------------------------------------------------------------------------
# Fused Pallas kernel: all LSTM layers + FC in one launch
# ---------------------------------------------------------------------------
def _fused_lstm_fc_kernel(*refs, num_layers):
    """Ref layout (positional):
        x_ref                               (T, Bp, D_in)   time-major input
        [w_ih_t, w_hh_t, bias] * num_layers (D_l,4H) (H,4H) (1,4H)
        fc_w_t, fc_b                        (H, O) (1, O)
        out_ref                             (Bp, O)
        seq_sc                              (T, Bp, H)  VMEM   hidden seq scratch
        gx_sc                               (T, Bp, 4H) VMEM   hoisted X@W_ih
        h_sc, c_sc                          (Bp, H)     VMEM   recurrence carry
    """
    x_ref = refs[0]
    idx = 1
    layer_refs = []
    for _ in range(num_layers):
        layer_refs.append(refs[idx:idx + 3])
        idx += 3
    fc_w_ref, fc_b_ref, out_ref = refs[idx], refs[idx + 1], refs[idx + 2]
    seq_sc, gx_sc, h_sc, c_sc = refs[idx + 3:idx + 7]

    T, Bp, _ = x_ref.shape
    H = h_sc.shape[1]

    for layer in range(num_layers):
        w_ih_ref, w_hh_ref, b_ref = layer_refs[layer]

        # --- hoisted input projection for ALL timesteps: one tall matmul ----
        inp = x_ref[...] if layer == 0 else seq_sc[...]          # (T, Bp, D_l)
        d_in = inp.shape[-1]
        gx = (
            jnp.dot(inp.reshape(T * Bp, d_in), w_ih_ref[...],
                    preferred_element_type=jnp.float32)
            + b_ref[...]
        )                                                        # (T*Bp, 4H)
        gx_sc[...] = gx.reshape(T, Bp, 4 * H)

        h_sc[...] = jnp.zeros_like(h_sc)
        c_sc[...] = jnp.zeros_like(c_sc)

        write_seq = layer < num_layers - 1   # last layer: only final h needed

        def step(t, carry, *, w_hh_ref=w_hh_ref, write_seq=write_seq):
            # only the recurrent matmul is on the serial critical path
            gates = gx_sc[t] + jnp.dot(h_sc[...], w_hh_ref[...],
                                       preferred_element_type=jnp.float32)
            i_g = jax.nn.sigmoid(gates[:, 0 * H:1 * H])
            f_g = jax.nn.sigmoid(gates[:, 1 * H:2 * H])
            g_g = jnp.tanh(gates[:, 2 * H:3 * H])
            o_g = jax.nn.sigmoid(gates[:, 3 * H:4 * H])

            c_new = f_g * c_sc[...] + i_g * g_g
            h_new = o_g * jnp.tanh(c_new)

            c_sc[...] = c_new
            h_sc[...] = h_new
            if write_seq:
                seq_sc[t] = h_new
            return carry

        lax.fori_loop(0, T, step, 0, unroll=True)

    # ---- final Linear on the last hidden state of the last layer -----------
    out_ref[...] = (
        jnp.dot(h_sc[...], fc_w_ref[...], preferred_element_type=jnp.float32)
        + fc_b_ref[...]
    )


# ---------------------------------------------------------------------------
# Wrapper
# ---------------------------------------------------------------------------
@functools.partial(jax.jit, static_argnames=("num_layers",))
def lstm_aqi_forward(x, params, num_layers):
    """x: (B, T, input_size) batch-first, like the PyTorch module."""
    B, T, _ = x.shape
    H = params["lstm"][0]["w_hh_t"].shape[0]
    O = params["fc"]["w_t"].shape[1]

    # sublane-dense batch (f32 sublane quantum = 8)
    Bp = ((B + 7) // 8) * 8

    x_tm = jnp.transpose(x.astype(jnp.float32), (1, 0, 2))       # (T, B, D)
    x_tm = jnp.pad(x_tm, ((0, 0), (0, Bp - B), (0, 0)))          # (T, Bp, D)

    flat_args = [x_tm]
    for layer in range(num_layers):
        p = params["lstm"][layer]
        flat_args += [p["w_ih_t"], p["w_hh_t"], p["bias"]]
    flat_args += [params["fc"]["w_t"], params["fc"]["b"]]

    out = pl.pallas_call(
        functools.partial(_fused_lstm_fc_kernel, num_layers=num_layers),
        out_shape=jax.ShapeDtypeStruct((Bp, O), jnp.float32),
        scratch_shapes=[
            pltpu.VMEM((T, Bp, H), jnp.float32),      # hidden-sequence scratch
            pltpu.VMEM((T, Bp, 4 * H), jnp.float32),  # hoisted input gates
            pltpu.VMEM((Bp, H), jnp.float32),         # h carry
            pltpu.VMEM((Bp, H), jnp.float32),         # c carry
        ],
        compiler_params=pltpu.CompilerParams(vmem_limit_bytes=64 << 20),
    )(*flat_args)

    return out[:B]                                               # (B, O)


# ---------------------------------------------------------------------------
# Parameters: PyTorch-style init, then a one-time prep (transpose/cast/fuse
# biases) done OUTSIDE the jitted forward.
# ---------------------------------------------------------------------------
def init_params(key, input_size, hidden_size, num_layers, output_size):
    """Raw PyTorch-shaped params, U(-1/sqrt(H), 1/sqrt(H))."""
    bound = 1.0 / jnp.sqrt(hidden_size)
    params = {"lstm": [], "fc": {}}
    for layer in range(num_layers):
        d_in = input_size if layer == 0 else hidden_size
        key, k1, k2, k3, k4 = jax.random.split(key, 5)
        params["lstm"].append({
            "w_ih": jax.random.uniform(k1, (4 * hidden_size, d_in),
                                       jnp.float32, -bound, bound),
            "w_hh": jax.random.uniform(k2, (4 * hidden_size, hidden_size),
                                       jnp.float32, -bound, bound),
            "b_ih": jax.random.uniform(k3, (4 * hidden_size,),
                                       jnp.float32, -bound, bound),
            "b_hh": jax.random.uniform(k4, (4 * hidden_size,),
                                       jnp.float32, -bound, bound),
        })
    key, k1, k2 = jax.random.split(key, 3)
    params["fc"]["w"] = jax.random.uniform(k1, (output_size, hidden_size),
                                           jnp.float32, -bound, bound)
    params["fc"]["b"] = jax.random.uniform(k2, (output_size,),
                                           jnp.float32, -bound, bound)
    return params


def prepare_params(raw):
    """One-time weight prep: pre-transposed, biases fused, f32."""
    prep = {"lstm": [], "fc": {}}
    for p in raw["lstm"]:
        prep["lstm"].append({
            "w_ih_t": jnp.asarray(p["w_ih"].T, jnp.float32),          # (D_in, 4H)
            "w_hh_t": jnp.asarray(p["w_hh"].T, jnp.float32),          # (H, 4H)
            "bias": (p["b_ih"] + p["b_hh"]).reshape(1, -1)
                                            .astype(jnp.float32),     # (1, 4H)
        })
    prep["fc"]["w_t"] = jnp.asarray(raw["fc"]["w"].T, jnp.float32)    # (H, O)
    prep["fc"]["b"] = raw["fc"]["b"].reshape(1, -1).astype(jnp.float32)
    return prep


# ---------------------------------------------------------------------------
# Pure-JAX reference (correctness check vs. PyTorch semantics)
# ---------------------------------------------------------------------------
def reference_forward(x, raw_params, num_layers, hidden_size):
    B = x.shape[0]
    seq = x
    for layer in range(num_layers):
        p = raw_params["lstm"][layer]
        h = jnp.zeros((B, hidden_size), jnp.float32)
        c = jnp.zeros((B, hidden_size), jnp.float32)
        outs = []
        for t in range(seq.shape[1]):
            gates = (seq[:, t, :] @ p["w_ih"].T + p["b_ih"]
                     + h @ p["w_hh"].T + p["b_hh"])
            i_g = jax.nn.sigmoid(gates[:, 0 * hidden_size:1 * hidden_size])
            f_g = jax.nn.sigmoid(gates[:, 1 * hidden_size:2 * hidden_size])
            g_g = jnp.tanh(gates[:, 2 * hidden_size:3 * hidden_size])
            o_g = jax.nn.sigmoid(gates[:, 3 * hidden_size:4 * hidden_size])
            c = f_g * c + i_g * g_g
            h = o_g * jnp.tanh(c)
            outs.append(h)
        seq = jnp.stack(outs, axis=1)
    return seq[:, -1, :] @ raw_params["fc"]["w"].T + raw_params["fc"]["b"]


# ---------------------------------------------------------------------------
if __name__ == "__main__":
    B, T = 2, 8
    input_size, hidden_size, num_layers, output_size = 4, 32, 2, 1

    key = jax.random.PRNGKey(0)
    key, xkey = jax.random.split(key)
    x = jax.random.normal(xkey, (B, T, input_size), jnp.float32)

    raw = init_params(key, input_size, hidden_size, num_layers, output_size)
    params = prepare_params(raw)

    out = lstm_aqi_forward(x, params, num_layers=num_layers)
    out = jax.block_until_ready(out)
    assert out.shape == (B, output_size), out.shape

    ref = reference_forward(x, raw, num_layers, hidden_size)
    assert jnp.allclose(out, ref, atol=1e-5, rtol=1e-5), (out, ref)

    print("KERNEL_OK")
</pallas_src>

<mosaic_0001>
module attributes {stable_mosaic.version = 11 : i64} {
  func.func @_fused_lstm_fc_kernel(%arg0: memref<8x8x4xf32, #tpu.memory_space<vmem>>, %arg1: memref<4x128xf32, #tpu.memory_space<vmem>>, %arg2: memref<32x128xf32, #tpu.memory_space<vmem>>, %arg3: memref<1x128xf32, #tpu.memory_space<vmem>>, %arg4: memref<32x128xf32, #tpu.memory_space<vmem>>, %arg5: memref<32x128xf32, #tpu.memory_space<vmem>>, %arg6: memref<1x128xf32, #tpu.memory_space<vmem>>, %arg7: memref<32x1xf32, #tpu.memory_space<vmem>>, %arg8: memref<1x1xf32, #tpu.memory_space<vmem>>, %arg9: memref<8x1xf32, #tpu.memory_space<vmem>>, %arg10: memref<8x8x32xf32, #tpu.memory_space<vmem>>, %arg11: memref<8x8x128xf32, #tpu.memory_space<vmem>>, %arg12: memref<8x32xf32, #tpu.memory_space<vmem>>, %arg13: memref<8x32xf32, #tpu.memory_space<vmem>>) attributes {dimension_semantics = [], scalar_prefetch = 0 : i64, scratch_operands = 4 : i64, tpu.core_type = #tpu.core_type<tc>} {
    %c0 = arith.constant 0 : index
    %c0_0 = arith.constant 0 : index
    %c0_1 = arith.constant 0 : index
    %0 = vector.load %arg0[%c0, %c0_0, %c0_1] : memref<8x8x4xf32, #tpu.memory_space<vmem>>, vector<8x8x4xf32>
    %1 = vector.shape_cast %0 : vector<8x8x4xf32> to vector<64x4xf32>
    %c0_2 = arith.constant 0 : index
    %c0_3 = arith.constant 0 : index
    %2 = vector.load %arg1[%c0_2, %c0_3] : memref<4x128xf32, #tpu.memory_space<vmem>>, vector<4x128xf32>
    %cst = arith.constant dense<0.000000e+00> : vector<64x128xf32>
    %3 = tpu.matmul %1, %2, %cst {dimension_numbers = #tpu.dot_dimension_numbers<[1], [0], [0], [1], [0, 0, 1, 1], [], []>} : vector<64x4xf32>, vector<4x128xf32>, vector<64x128xf32> -> vector<64x128xf32>
    %c0_4 = arith.constant 0 : index
    %c0_5 = arith.constant 0 : index
    %4 = vector.load %arg3[%c0_4, %c0_5] : memref<1x128xf32, #tpu.memory_space<vmem>>, vector<1x128xf32>
    %5 = vector.broadcast %4 : vector<1x128xf32> to vector<64x128xf32>
    %6 = arith.addf %3, %5 : vector<64x128xf32>
    %7 = vector.shape_cast %6 : vector<64x128xf32> to vector<8x8x128xf32>
    %c0_6 = arith.constant 0 : index
    %c0_7 = arith.constant 0 : index
    %c0_8 = arith.constant 0 : index
    %8 = vector.load %arg11[%c0_6, %c0_7, %c0_8] : memref<8x8x128xf32, #tpu.memory_space<vmem>>, vector<8x8x128xf32>
    tpu.vector_store %arg11[%c0_6, %c0_7, %c0_8], %7 {strides = array<i32>} : memref<8x8x128xf32, #tpu.memory_space<vmem>>, vector<8x8x128xf32>,
    %cst_9 = arith.constant 0.000000e+00 : f32
    %9 = vector.broadcast %cst_9 : f32 to vector<8x32xf32>
    %c0_10 = arith.constant 0 : index
    %c0_11 = arith.constant 0 : index
    %10 = vector.load %arg12[%c0_10, %c0_11] : memref<8x32xf32, #tpu.memory_space<vmem>>, vector<8x32xf32>
    tpu.vector_store %arg12[%c0_10, %c0_11], %9 {strides = array<i32>} : memref<8x32xf32, #tpu.memory_space<vmem>>, vector<8x32xf32>,
    %cst_12 = arith.constant 0.000000e+00 : f32
    %11 = vector.broadcast %cst_12 : f32 to vector<8x32xf32>
    %c0_13 = arith.constant 0 : index
    %c0_14 = arith.constant 0 : index
    %12 = vector.load %arg13[%c0_13, %c0_14] : memref<8x32xf32, #tpu.memory_space<vmem>>, vector<8x32xf32>
    tpu.vector_store %arg13[%c0_13, %c0_14], %11 {strides = array<i32>} : memref<8x32xf32, #tpu.memory_space<vmem>>, vector<8x32xf32>,
    %c0_i32 = arith.constant 0 : i32
    %13 = arith.index_cast %c0_i32 : i32 to index
    %c0_15 = arith.constant 0 : index
    %c0_16 = arith.constant 0 : index
    %14 = vector.load %arg11[%13, %c0_15, %c0_16] : memref<8x8x128xf32, #tpu.memory_space<vmem>>, vector<1x8x128xf32>
    %15 = vector.shape_cast %14 : vector<1x8x128xf32> to vector<8x128xf32>
    %c0_17 = arith.constant 0 : index
    %c0_18 = arith.constant 0 : index
    %16 = vector.load %arg12[%c0_17, %c0_18] : memref<8x32xf32, #tpu.memory_space<vmem>>, vector<8x32xf32>
    %c0_19 = arith.constant 0 : index
    %c0_20 = arith.constant 0 : index
    %17 = vector.load %arg2[%c0_19, %c0_20] : memref<32x128xf32, #tpu.memory_space<vmem>>, vector<32x128xf32>
    %cst_21 = arith.constant dense<0.000000e+00> : vector<8x128xf32>
    %18 = tpu.matmul %16, %17, %cst_21 {dimension_numbers = #tpu.dot_dimension_numbers<[1], [0], [0], [1], [0, 0, 1, 1], [], []>} : vector<8x32xf32>, vector<32x128xf32>, vector<8x128xf32> -> vector<8x128xf32>
    %19 = arith.addf %15, %18 : vector<8x128xf32>
    %20 = vector.extract_strided_slice %19 {offsets = [0, 0], sizes = [8, 32], strides = [1, 1]} : vector<8x128xf32> to vector<8x32xf32>
    %21 = arith.negf %20 : vector<8x32xf32>
    %22 = math.exp %21 : vector<8x32xf32>
    %cst_22 = arith.constant 1.000000e+00 : f32
    %23 = vector.broadcast %cst_22 : f32 to vector<8x32xf32>
    %24 = arith.addf %23, %22 : vector<8x32xf32>
    %25 = arith.divf %23, %24 : vector<8x32xf32>
    %26 = vector.extract_strided_slice %19 {offsets = [0, 32], sizes = [8, 32], strides = [1, 1]} : vector<8x128xf32> to vector<8x32xf32>
    %27 = arith.negf %26 : vector<8x32xf32>
    %28 = math.exp %27 : vector<8x32xf32>
    %cst_23 = arith.constant 1.000000e+00 : f32
    %29 = vector.broadcast %cst_23 : f32 to vector<8x32xf32>
    %30 = arith.addf %29, %28 : vector<8x32xf32>
    %31 = arith.divf %29, %30 : vector<8x32xf32>
    %32 = vector.extract_strided_slice %19 {offsets = [0, 64], sizes = [8, 32], strides = [1, 1]} : vector<8x128xf32> to vector<8x32xf32>
    %33 = math.tanh %32 : vector<8x32xf32>
    %34 = vector.extract_strided_slice %19 {offsets = [0, 96], sizes = [8, 32], strides = [1, 1]} : vector<8x128xf32> to vector<8x32xf32>
    %35 = arith.negf %34 : vector<8x32xf32>
    %36 = math.exp %35 : vector<8x32xf32>
    %cst_24 = arith.constant 1.000000e+00 : f32
    %37 = vector.broadcast %cst_24 : f32 to vector<8x32xf32>
    %38 = arith.addf %37, %36 : vector<8x32xf32>
    %39 = arith.divf %37, %38 : vector<8x32xf32>
    %c0_25 = arith.constant 0 : index
    %c0_26 = arith.constant 0 : index
    %40 = vector.load %arg13[%c0_25, %c0_26] : memref<8x32xf32, #tpu.memory_space<vmem>>, vector<8x32xf32>
    %41 = arith.mulf %31, %40 : vector<8x32xf32>
    %42 = arith.mulf %25, %33 : vector<8x32xf32>
    %43 = arith.addf %41, %42 : vector<8x32xf32>
    %44 = math.tanh %43 : vector<8x32xf32>
    %45 = arith.mulf %39, %44 : vector<8x32xf32>
    %c0_27 = arith.constant 0 : index
    %c0_28 = arith.constant 0 : index
    %46 = vector.load %arg13[%c0_27, %c0_28] : memref<8x32xf32, #tpu.memory_space<vmem>>, vector<8x32xf32>
    tpu.vector_store %arg13[%c0_27, %c0_28], %43 {strides = array<i32>} : memref<8x32xf32, #tpu.memory_space<vmem>>, vector<8x32xf32>,
    %c0_29 = arith.constant 0 : index
    %c0_30 = arith.constant 0 : index
    %47 = vector.load %arg12[%c0_29, %c0_30] : memref<8x32xf32, #tpu.memory_space<vmem>>, vector<8x32xf32>
    tpu.vector_store %arg12[%c0_29, %c0_30], %45 {strides = array<i32>} : memref<8x32xf32, #tpu.memory_space<vmem>>, vector<8x32xf32>,
    %48 = arith.index_cast %c0_i32 : i32 to index
    %c0_31 = arith.constant 0 : index
    %c0_32 = arith.constant 0 : index
    %49 = vector.load %arg10[%48, %c0_31, %c0_32] : memref<8x8x32xf32, #tpu.memory_space<vmem>>, vector<1x8x32xf32>
    %50 = vector.shape_cast %49 : vector<1x8x32xf32> to vector<8x32xf32>
    %51 = vector.shape_cast %45 : vector<8x32xf32> to vector<1x8x32xf32>
    tpu.vector_store %arg10[%48, %c0_31, %c0_32], %51 {strides = array<i32>} : memref<8x8x32xf32, #tpu.memory_space<vmem>>, vector<1x8x32xf32>,
    %c1_i32 = arith.constant 1 : i32
    %52 = arith.index_cast %c1_i32 : i32 to index
    %c0_33 = arith.constant 0 : index
    %c0_34 = arith.constant 0 : index
    %53 = vector.load %arg11[%52, %c0_33, %c0_34] : memref<8x8x128xf32, #tpu.memory_space<vmem>>, vector<1x8x128xf32>
    %54 = vector.shape_cast %53 : vector<1x8x128xf32> to vector<8x128xf32>
    %c0_35 = arith.constant 0 : index
    %c0_36 = arith.constant 0 : index
    %55 = vector.load %arg12[%c0_35, %c0_36] : memref<8x32xf32, #tpu.memory_space<vmem>>, vector<8x32xf32>
    %c0_37 = arith.constant 0 : index
    %c0_38 = arith.constant 0 : index
    %56 = vector.load %arg2[%c0_37, %c0_38] : memref<32x128xf32, #tpu.memory_space<vmem>>, vector<32x128xf32>
    %cst_39 = arith.constant dense<0.000000e+00> : vector<8x128xf32>
    %57 = tpu.matmul %55, %56, %cst_39 {dimension_numbers = #tpu.dot_dimension_numbers<[1], [0], [0], [1], [0, 0, 1, 1], [], []>} : vector<8x32xf32>, vector<32x128xf32>, vector<8x128xf32> -> vector<8x128xf32>
    %58 = arith.addf %54, %57 : vector<8x128xf32>
    %59 = vector.extract_strided_slice %58 {offsets = [0, 0], sizes = [8, 32], strides = [1, 1]} : vector<8x128xf32> to vector<8x32xf32>
    %60 = arith.negf %59 : vector<8x32xf32>
    %61 = math.exp %60 : vector<8x32xf32>
    %cst_40 = arith.constant 1.000000e+00 : f32
    %62 = vector.broadcast %cst_40 : f32 to vector<8x32xf32>
    %63 = arith.addf %62, %61 : vector<8x32xf32>
    %64 = arith.divf %62, %63 : vector<8x32xf32>
    %65 = vector.extract_strided_slice %58 {offsets = [0, 32], sizes = [8, 32], strides = [1, 1]} : vector<8x128xf32> to vector<8x32xf32>
    %66 = arith.negf %65 : vector<8x32xf32>
    %67 = math.exp %66 : vector<8x32xf32>
    %cst_41 = arith.constant 1.000000e+00 : f32
    %68 = vector.broadcast %cst_41 : f32 to vector<8x32xf32>
    %69 = arith.addf %68, %67 : vector<8x32xf32>
    %70 = arith.divf %68, %69 : vector<8x32xf32>
    %71 = vector.extract_strided_slice %58 {offsets = [0, 64], sizes = [8, 32], strides = [1, 1]} : vector<8x128xf32> to vector<8x32xf32>
    %72 = math.tanh %71 : vector<8x32xf32>
    %73 = vector.extract_strided_slice %58 {offsets = [0, 96], sizes = [8, 32], strides = [1, 1]} : vector<8x128xf32> to vector<8x32xf32>
    %74 = arith.negf %73 : vector<8x32xf32>
    %75 = math.exp %74 : vector<8x32xf32>
    %cst_42 = arith.constant 1.000000e+00 : f32
    %76 = vector.broadcast %cst_42 : f32 to vector<8x32xf32>
    %77 = arith.addf %76, %75 : vector<8x32xf32>
    %78 = arith.divf %76, %77 : vector<8x32xf32>
    %c0_43 = arith.constant 0 : index
    %c0_44 = arith.constant 0 : index
    %79 = vector.load %arg13[%c0_43, %c0_44] : memref<8x32xf32, #tpu.memory_space<vmem>>, vector<8x32xf32>
    %80 = arith.mulf %70, %79 : vector<8x32xf32>
    %81 = arith.mulf %64, %72 : vector<8x32xf32>
    %82 = arith.addf %80, %81 : vector<8x32xf32>
    %83 = math.tanh %82 : vector<8x32xf32>
    %84 = arith.mulf %78, %83 : vector<8x32xf32>
    %c0_45 = arith.constant 0 : index
    %c0_46 = arith.constant 0 : index
    %85 = vector.load %arg13[%c0_45, %c0_46] : memref<8x32xf32, #tpu.memory_space<vmem>>, vector<8x32xf32>
    tpu.vector_store %arg13[%c0_45, %c0_46], %82 {strides = array<i32>} : memref<8x32xf32, #tpu.memory_space<vmem>>, vector<8x32xf32>,
    %c0_47 = arith.constant 0 : index
    %c0_48 = arith.constant 0 : index
    %86 = vector.load %arg12[%c0_47, %c0_48] : memref<8x32xf32, #tpu.memory_space<vmem>>, vector<8x32xf32>
    tpu.vector_store %arg12[%c0_47, %c0_48], %84 {strides = array<i32>} : memref<8x32xf32, #tpu.memory_space<vmem>>, vector<8x32xf32>,
    %87 = arith.index_cast %c1_i32 : i32 to index
    %c0_49 = arith.constant 0 : index
    %c0_50 = arith.constant 0 : index
    %88 = vector.load %arg10[%87, %c0_49, %c0_50] : memref<8x8x32xf32, #tpu.memory_space<vmem>>, vector<1x8x32xf32>
    %89 = vector.shape_cast %88 : vector<1x8x32xf32> to vector<8x32xf32>
    %90 = vector.shape_cast %84 : vector<8x32xf32> to vector<1x8x32xf32>
    tpu.vector_store %arg10[%87, %c0_49, %c0_50], %90 {strides = array<i32>} : memref<8x8x32xf32, #tpu.memory_space<vmem>>, vector<1x8x32xf32>,
    %c2_i32 = arith.constant 2 : i32
    %91 = arith.index_cast %c2_i32 : i32 to index
    %c0_51 = arith.constant 0 : index
    %c0_52 = arith.constant 0 : index
    %92 = vector.load %arg11[%91, %c0_51, %c0_52] : memref<8x8x128xf32, #tpu.memory_space<vmem>>, vector<1x8x128xf32>
    %93 = vector.shape_cast %92 : vector<1x8x128xf32> to vector<8x128xf32>
    %c0_53 = arith.constant 0 : index
    %c0_54 = arith.constant 0 : index
    %94 = vector.load %arg12[%c0_53, %c0_54] : memref<8x32xf32, #tpu.memory_space<vmem>>, vector<8x32xf32>
    %c0_55 = arith.constant 0 : index
    %c0_56 = arith.constant 0 : index
    %95 = vector.load %arg2[%c0_55, %c0_56] : memref<32x128xf32, #tpu.memory_space<vmem>>, vector<32x128xf32>
    %cst_57 = arith.constant dense<0.000000e+00> : vector<8x128xf32>
    %96 = tpu.matmul %94, %95, %cst_57 {dimension_numbers = #tpu.dot_dimension_numbers<[1], [0], [0], [1], [0, 0, 1, 1], [], []>} : vector<8x32xf32>, vector<32x128xf32>, vector<8x128xf32> -> vector<8x128xf32>
    %97 = arith.addf %93, %96 : vector<8x128xf32>
    %98 = vector.extract_strided_slice %97 {offsets = [0, 0], sizes = [8, 32], strides = [1, 1]} : vector<8x128xf32> to vector<8x32xf32>
    %99 = arith.negf %98 : vector<8x32xf32>
    %100 = math.exp %99 : vector<8x32xf32>
    %cst_58 = arith.constant 1.000000e+00 : f32
    %101 = vector.broadcast %cst_58 : f32 to vector<8x32xf32>
    %102 = arith.addf %101, %100 : vector<8x32xf32>
    %103 = arith.divf %101, %102 : vector<8x32xf32>
    %104 = vector.extract_strided_slice %97 {offsets = [0, 32], sizes = [8, 32], strides = [1, 1]} : vector<8x128xf32> to vector<8x32xf32>
    %105 = arith.negf %104 : vector<8x32xf32>
    %106 = math.exp %105 : vector<8x32xf32>
    %cst_59 = arith.constant 1.000000e+00 : f32
    %107 = vector.broadcast %cst_59 : f32 to vector<8x32xf32>
    %108 = arith.addf %107, %106 : vector<8x32xf32>
    %109 = arith.divf %107, %108 : vector<8x32xf32>
    %110 = vector.extract_strided_slice %97 {offsets = [0, 64], sizes = [8, 32], strides = [1, 1]} : vector<8x128xf32> to vector<8x32xf32>
    %111 = math.tanh %110 : vector<8x32xf32>
    %112 = vector.extract_strided_slice %97 {offsets = [0, 96], sizes = [8, 32], strides = [1, 1]} : vector<8x128xf32> to vector<8x32xf32>
    %113 = arith.negf %112 : vector<8x32xf32>
    %114 = math.exp %113 : vector<8x32xf32>
    %cst_60 = arith.constant 1.000000e+00 : f32
    %115 = vector.broadcast %cst_60 : f32 to vector<8x32xf32>
    %116 = arith.addf %115, %114 : vector<8x32xf32>
    %117 = arith.divf %115, %116 : vector<8x32xf32>
    %c0_61 = arith.constant 0 : index
    %c0_62 = arith.constant 0 : index
    %118 = vector.load %arg13[%c0_61, %c0_62] : memref<8x32xf32, #tpu.memory_space<vmem>>, vector<8x32xf32>
    %119 = arith.mulf %109, %118 : vector<8x32xf32>
    %120 = arith.mulf %103, %111 : vector<8x32xf32>
    %121 = arith.addf %119, %120 : vector<8x32xf32>
    %122 = math.tanh %121 : vector<8x32xf32>
    %123 = arith.mulf %117, %122 : vector<8x32xf32>
    %c0_63 = arith.constant 0 : index
    %c0_64 = arith.constant 0 : index
    %124 = vector.load %arg13[%c0_63, %c0_64] : memref<8x32xf32, #tpu.memory_space<vmem>>, vector<8x32xf32>
    tpu.vector_store %arg13[%c0_63, %c0_64], %121 {strides = array<i32>} : memref<8x32xf32, #tpu.memory_space<vmem>>, vector<8x32xf32>,
    %c0_65 = arith.constant 0 : index
    %c0_66 = arith.constant 0 : index
    %125 = vector.load %arg12[%c0_65, %c0_66] : memref<8x32xf32, #tpu.memory_space<vmem>>, vector<8x32xf32>
    tpu.vector_store %arg12[%c0_65, %c0_66], %123 {strides = array<i32>} : memref<8x32xf32, #tpu.memory_space<vmem>>, vector<8x32xf32>,
    %126 = arith.index_cast %c2_i32 : i32 to index
    %c0_67 = arith.constant 0 : index
    %c0_68 = arith.constant 0 : index
    %127 = vector.load %arg10[%126, %c0_67, %c0_68] : memref<8x8x32xf32, #tpu.memory_space<vmem>>, vector<1x8x32xf32>
    %128 = vector.shape_cast %127 : vector<1x8x32xf32> to vector<8x32xf32>
    %129 = vector.shape_cast %123 : vector<8x32xf32> to vector<1x8x32xf32>
    tpu.vector_store %arg10[%126, %c0_67, %c0_68], %129 {strides = array<i32>} : memref<8x8x32xf32, #tpu.memory_space<vmem>>, vector<1x8x32xf32>,
    %c3_i32 = arith.constant 3 : i32
    %130 = arith.index_cast %c3_i32 : i32 to index
    %c0_69 = arith.constant 0 : index
    %c0_70 = arith.constant 0 : index
    %131 = vector.load %arg11[%130, %c0_69, %c0_70] : memref<8x8x128xf32, #tpu.memory_space<vmem>>, vector<1x8x128xf32>
    %132 = vector.shape_cast %131 : vector<1x8x128xf32> to vector<8x128xf32>
    %c0_71 = arith.constant 0 : index
    %c0_72 = arith.constant 0 : index
    %133 = vector.load %arg12[%c0_71, %c0_72] : memref<8x32xf32, #tpu.memory_space<vmem>>, vector<8x32xf32>
    %c0_73 = arith.constant 0 : index
    %c0_74 = arith.constant 0 : index
    %134 = vector.load %arg2[%c0_73, %c0_74] : memref<32x128xf32, #tpu.memory_space<vmem>>, vector<32x128xf32>
    %cst_75 = arith.constant dense<0.000000e+00> : vector<8x128xf32>
    %135 = tpu.matmul %133, %134, %cst_75 {dimension_numbers = #tpu.dot_dimension_numbers<[1], [0], [0], [1], [0, 0, 1, 1], [], []>} : vector<8x32xf32>, vector<32x128xf32>, vector<8x128xf32> -> vector<8x128xf32>
    %136 = arith.addf %132, %135 : vector<8x128xf32>
    %137 = vector.extract_strided_slice %136 {offsets = [0, 0], sizes = [8, 32], strides = [1, 1]} : vector<8x128xf32> to vector<8x32xf32>
    %138 = arith.negf %137 : vector<8x32xf32>
    %139 = math.exp %138 : vector<8x32xf32>
    %cst_76 = arith.constant 1.000000e+00 : f32
    %140 = vector.broadcast %cst_76 : f32 to vector<8x32xf32>
    %141 = arith.addf %140, %139 : vector<8x32xf32>
    %142 = arith.divf %140, %141 : vector<8x32xf32>
    %143 = vector.extract_strided_slice %136 {offsets = [0, 32], sizes = [8, 32], strides = [1, 1]} : vector<8x128xf32> to vector<8x32xf32>
    %144 = arith.negf %143 : vector<8x32xf32>
    %145 = math.exp %144 : vector<8x32xf32>
    %cst_77 = arith.constant 1.000000e+00 : f32
    %146 = vector.broadcast %cst_77 : f32 to vector<8x32xf32>
    %147 = arith.addf %146, %145 : vector<8x32xf32>
    %148 = arith.divf %146, %147 : vector<8x32xf32>
    %149 = vector.extract_strided_slice %136 {offsets = [0, 64], sizes = [8, 32], strides = [1, 1]} : vector<8x128xf32> to vector<8x32xf32>
    %150 = math.tanh %149 : vector<8x32xf32>
    %151 = vector.extract_strided_slice %136 {offsets = [0, 96], sizes = [8, 32], strides = [1, 1]} : vector<8x128xf32> to vector<8x32xf32>
    %152 = arith.negf %151 : vector<8x32xf32>
    %153 = math.exp %152 : vector<8x32xf32>
    %cst_78 = arith.constant 1.000000e+00 : f32
    %154 = vector.broadcast %cst_78 : f32 to vector<8x32xf32>
    %155 = arith.addf %154, %153 : vector<8x32xf32>
    %156 = arith.divf %154, %155 : vector<8x32xf32>
    %c0_79 = arith.constant 0 : index
    %c0_80 = arith.constant 0 : index
    %157 = vector.load %arg13[%c0_79, %c0_80] : memref<8x32xf32, #tpu.memory_space<vmem>>, vector<8x32xf32>
    %158 = arith.mulf %148, %157 : vector<8x32xf32>
    %159 = arith.mulf %142, %150 : vector<8x32xf32>
    %160 = arith.addf %158, %159 : vector<8x32xf32>
    %161 = math.tanh %160 : vector<8x32xf32>
    %162 = arith.mulf %156, %161 : vector<8x32xf32>
    %c0_81 = arith.constant 0 : index
    %c0_82 = arith.constant 0 : index
    %163 = vector.load %arg13[%c0_81, %c0_82] : memref<8x32xf32, #tpu.memory_space<vmem>>, vector<8x32xf32>
    tpu.vector_store %arg13[%c0_81, %c0_82], %160 {strides = array<i32>} : memref<8x32xf32, #tpu.memory_space<vmem>>, vector<8x32xf32>,
    %c0_83 = arith.constant 0 : index
    %c0_84 = arith.constant 0 : index
    %164 = vector.load %arg12[%c0_83, %c0_84] : memref<8x32xf32, #tpu.memory_space<vmem>>, vector<8x32xf32>
    tpu.vector_store %arg12[%c0_83, %c0_84], %162 {strides = array<i32>} : memref<8x32xf32, #tpu.memory_space<vmem>>, vector<8x32xf32>,
    %165 = arith.index_cast %c3_i32 : i32 to index
    %c0_85 = arith.constant 0 : index
    %c0_86 = arith.constant 0 : index
    %166 = vector.load %arg10[%165, %c0_85, %c0_86] : memref<8x8x32xf32, #tpu.memory_space<vmem>>, vector<1x8x32xf32>
    %167 = vector.shape_cast %166 : vector<1x8x32xf32> to vector<8x32xf32>
    %168 = vector.shape_cast %162 : vector<8x32xf32> to vector<1x8x32xf32>
    tpu.vector_store %arg10[%165, %c0_85, %c0_86], %168 {strides = array<i32>} : memref<8x8x32xf32, #tpu.memory_space<vmem>>, vector<1x8x32xf32>,
    %c4_i32 = arith.constant 4 : i32
    %169 = arith.index_cast %c4_i32 : i32 to index
    %c0_87 = arith.constant 0 : index
    %c0_88 = arith.constant 0 : index
    %170 = vector.load %arg11[%169, %c0_87, %c0_88] : memref<8x8x128xf32, #tpu.memory_space<vmem>>, vector<1x8x128xf32>
    %171 = vector.shape_cast %170 : vector<1x8x128xf32> to vector<8x128xf32>
    %c0_89 = arith.constant 0 : index
    %c0_90 = arith.constant 0 : index
    %172 = vector.load %arg12[%c0_89, %c0_90] : memref<8x32xf32, #tpu.memory_space<vmem>>, vector<8x32xf32>
    %c0_91 = arith.constant 0 : index
    %c0_92 = arith.constant 0 : index
    %173 = vector.load %arg2[%c0_91, %c0_92] : memref<32x128xf32, #tpu.memory_space<vmem>>, vector<32x128xf32>
    %cst_93 = arith.constant dense<0.000000e+00> : vector<8x128xf32>
    %174 = tpu.matmul %172, %173, %cst_93 {dimension_numbers = #tpu.dot_dimension_numbers<[1], [0], [0], [1], [0, 0, 1, 1], [], []>} : vector<8x32xf32>, vector<32x128xf32>, vector<8x128xf32> -> vector<8x128xf32>
    %175 = arith.addf %171, %174 : vector<8x128xf32>
    %176 = vector.extract_strided_slice %175 {offsets = [0, 0], sizes = [8, 32], strides = [1, 1]} : vector<8x128xf32> to vector<8x32xf32>
    %177 = arith.negf %176 : vector<8x32xf32>
    %178 = math.exp %177 : vector<8x32xf32>
    %cst_94 = arith.constant 1.000000e+00 : f32
    %179 = vector.broadcast %cst_94 : f32 to vector<8x32xf32>
    %180 = arith.addf %179, %178 : vector<8x32xf32>
    %181 = arith.divf %179, %180 : vector<8x32xf32>
    %182 = vector.extract_strided_slice %175 {offsets = [0, 32], sizes = [8, 32], strides = [1, 1]} : vector<8x128xf32> to vector<8x32xf32>
    %183 = arith.negf %182 : vector<8x32xf32>
    %184 = math.exp %183 : vector<8x32xf32>
    %cst_95 = arith.constant 1.000000e+00 : f32
    %185 = vector.broadcast %cst_95 : f32 to vector<8x32xf32>
    %186 = arith.addf %185, %184 : vector<8x32xf32>
    %187 = arith.divf %185, %186 : vector<8x32xf32>
    %188 = vector.extract_strided_slice %175 {offsets = [0, 64], sizes = [8, 32], strides = [1, 1]} : vector<8x128xf32> to vector<8x32xf32>
    %189 = math.tanh %188 : vector<8x32xf32>
    %190 = vector.extract_strided_slice %175 {offsets = [0, 96], sizes = [8, 32], strides = [1, 1]} : vector<8x128xf32> to vector<8x32xf32>
    %191 = arith.negf %190 : vector<8x32xf32>
    %192 = math.exp %191 : vector<8x32xf32>
    %cst_96 = arith.constant 1.000000e+00 : f32
    %193 = vector.broadcast %cst_96 : f32 to vector<8x32xf32>
    %194 = arith.addf %193, %192 : vector<8x32xf32>
    %195 = arith.divf %193, %194 : vector<8x32xf32>
    %c0_97 = arith.constant 0 : index
    %c0_98 = arith.constant 0 : index
    %196 = vector.load %arg13[%c0_97, %c0_98] : memref<8x32xf32, #tpu.memory_space<vmem>>, vector<8x32xf32>
    %197 = arith.mulf %187, %196 : vector<8x32xf32>
    %198 = arith.mulf %181, %189 : vector<8x32xf32>
    %199 = arith.addf %197, %198 : vector<8x32xf32>
    %200 = math.tanh %199 : vector<8x32xf32>
    %201 = arith.mulf %195, %200 : vector<8x32xf32>
    %c0_99 = arith.constant 0 : index
    %c0_100 = arith.constant 0 : index
    %202 = vector.load %arg13[%c0_99, %c0_100] : memref<8x32xf32, #tpu.memory_space<vmem>>, vector<8x32xf32>
    tpu.vector_store %arg13[%c0_99, %c0_100], %199 {strides = array<i32>} : memref<8x32xf32, #tpu.memory_space<vmem>>, vector<8x32xf32>,
    %c0_101 = arith.constant 0 : index
    %c0_102 = arith.constant 0 : index
    %203 = vector.load %arg12[%c0_101, %c0_102] : memref<8x32xf32, #tpu.memory_space<vmem>>, vector<8x32xf32>
    tpu.vector_store %arg12[%c0_101, %c0_102], %201 {strides = array<i32>} : memref<8x32xf32, #tpu.memory_space<vmem>>, vector<8x32xf32>,
    %204 = arith.index_cast %c4_i32 : i32 to index
    %c0_103 = arith.constant 0 : index
    %c0_104 = arith.constant 0 : index
    %205 = vector.load %arg10[%204, %c0_103, %c0_104] : memref<8x8x32xf32, #tpu.memory_space<vmem>>, vector<1x8x32xf32>
    %206 = vector.shape_cast %205 : vector<1x8x32xf32> to vector<8x32xf32>
    %207 = vector.shape_cast %201 : vector<8x32xf32> to vector<1x8x32xf32>
    tpu.vector_store %arg10[%204, %c0_103, %c0_104], %207 {strides = array<i32>} : memref<8x8x32xf32, #tpu.memory_space<vmem>>, vector<1x8x32xf32>,
    %c5_i32 = arith.constant 5 : i32
    %208 = arith.index_cast %c5_i32 : i32 to index
    %c0_105 = arith.constant 0 : index
    %c0_106 = arith.constant 0 : index
    %209 = vector.load %arg11[%208, %c0_105, %c0_106] : memref<8x8x128xf32, #tpu.memory_space<vmem>>, vector<1x8x128xf32>
    %210 = vector.shape_cast %209 : vector<1x8x128xf32> to vector<8x128xf32>
    %c0_107 = arith.constant 0 : index
    %c0_108 = arith.constant 0 : index
    %211 = vector.load %arg12[%c0_107, %c0_108] : memref<8x32xf32, #tpu.memory_space<vmem>>, vector<8x32xf32>
    %c0_109 = arith.constant 0 : index
    %c0_110 = arith.constant 0 : index
    %212 = vector.load %arg2[%c0_109, %c0_110] : memref<32x128xf32, #tpu.memory_space<vmem>>, vector<32x128xf32>
    %cst_111 = arith.constant dense<0.000000e+00> : vector<8x128xf32>
    %213 = tpu.matmul %211, %212, %cst_111 {dimension_numbers = #tpu.dot_dimension_numbers<[1], [0], [0], [1], [0, 0, 1, 1], [], []>} : vector<8x32xf32>, vector<32x128xf32>, vector<8x128xf32> -> vector<8x128xf32>
    %214 = arith.addf %210, %213 : vector<8x128xf32>
    %215 = vector.extract_strided_slice %214 {offsets = [0, 0], sizes = [8, 32], strides = [1, 1]} : vector<8x128xf32> to vector<8x32xf32>
    %216 = arith.negf %215 : vector<8x32xf32>
    %217 = math.exp %216 : vector<8x32xf32>
    %cst_112 = arith.constant 1.000000e+00 : f32
    %218 = vector.broadcast %cst_112 : f32 to vector<8x32xf32>
    %219 = arith.addf %218, %217 : vector<8x32xf32>
    %220 = arith.divf %218, %219 : vector<8x32xf32>
    %221 = vector.extract_strided_slice %214 {offsets = [0, 32], sizes = [8, 32], strides = [1, 1]} : vector<8x128xf32> to vector<8x32xf32>
    %222 = arith.negf %221 : vector<8x32xf32>
    %223 = math.exp %222 : vector<8x32xf32>
    %cst_113 = arith.constant 1.000000e+00 : f32
    %224 = vector.broadcast %cst_113 : f32 to vector<8x32xf32>
    %225 = arith.addf %224, %223 : vector<8x32xf32>
    %226 = arith.divf %224, %225 : vector<8x32xf32>
    %227 = vector.extract_strided_slice %214 {offsets = [0, 64], sizes = [8, 32], strides = [1, 1]} : vector<8x128xf32> to vector<8x32xf32>
    %228 = math.tanh %227 : vector<8x32xf32>
    %229 = vector.extract_strided_slice %214 {offsets = [0, 96], sizes = [8, 32], strides = [1, 1]} : vector<8x128xf32> to vector<8x32xf32>
    %230 = arith.negf %229 : vector<8x32xf32>
    %231 = math.exp %230 : vector<8x32xf32>
    %cst_114 = arith.constant 1.000000e+00 : f32
    %232 = vector.broadcast %cst_114 : f32 to vector<8x32xf32>
    %233 = arith.addf %232, %231 : vector<8x32xf32>
    %234 = arith.divf %232, %233 : vector<8x32xf32>
    %c0_115 = arith.constant 0 : index
    %c0_116 = arith.constant 0 : index
    %235 = vector.load %arg13[%c0_115, %c0_116] : memref<8x32xf32, #tpu.memory_space<vmem>>, vector<8x32xf32>
    %236 = arith.mulf %226, %235 : vector<8x32xf32>
    %237 = arith.mulf %220, %228 : vector<8x32xf32>
    %238 = arith.addf %236, %237 : vector<8x32xf32>
    %239 = math.tanh %238 : vector<8x32xf32>
    %240 = arith.mulf %234, %239 : vector<8x32xf32>
    %c0_117 = arith.constant 0 : index
    %c0_118 = arith.constant 0 : index
    %241 = vector.load %arg13[%c0_117, %c0_118] : memref<8x32xf32, #tpu.memory_space<vmem>>, vector<8x32xf32>
    tpu.vector_store %arg13[%c0_117, %c0_118], %238 {strides = array<i32>} : memref<8x32xf32, #tpu.memory_space<vmem>>, vector<8x32xf32>,
    %c0_119 = arith.constant 0 : index
    %c0_120 = arith.constant 0 : index
    %242 = vector.load %arg12[%c0_119, %c0_120] : memref<8x32xf32, #tpu.memory_space<vmem>>, vector<8x32xf32>
    tpu.vector_store %arg12[%c0_119, %c0_120], %240 {strides = array<i32>} : memref<8x32xf32, #tpu.memory_space<vmem>>, vector<8x32xf32>,
    %243 = arith.index_cast %c5_i32 : i32 to index
    %c0_121 = arith.constant 0 : index
    %c0_122 = arith.constant 0 : index
    %244 = vector.load %arg10[%243, %c0_121, %c0_122] : memref<8x8x32xf32, #tpu.memory_space<vmem>>, vector<1x8x32xf32>
    %245 = vector.shape_cast %244 : vector<1x8x32xf32> to vector<8x32xf32>
    %246 = vector.shape_cast %240 : vector<8x32xf32> to vector<1x8x32xf32>
    tpu.vector_store %arg10[%243, %c0_121, %c0_122], %246 {strides = array<i32>} : memref<8x8x32xf32, #tpu.memory_space<vmem>>, vector<1x8x32xf32>,
    %c6_i32 = arith.constant 6 : i32
    %247 = arith.index_cast %c6_i32 : i32 to index
    %c0_123 = arith.constant 0 : index
    %c0_124 = arith.constant 0 : index
    %248 = vector.load %arg11[%247, %c0_123, %c0_124] : memref<8x8x128xf32, #tpu.memory_space<vmem>>, vector<1x8x128xf32>
    %249 = vector.shape_cast %248 : vector<1x8x128xf32> to vector<8x128xf32>
    %c0_125 = arith.constant 0 : index
    %c0_126 = arith.constant 0 : index
    %250 = vector.load %arg12[%c0_125, %c0_126] : memref<8x32xf32, #tpu.memory_space<vmem>>, vector<8x32xf32>
    %c0_127 = arith.constant 0 : index
    %c0_128 = arith.constant 0 : index
    %251 = vector.load %arg2[%c0_127, %c0_128] : memref<32x128xf32, #tpu.memory_space<vmem>>, vector<32x128xf32>
    %cst_129 = arith.constant dense<0.000000e+00> : vector<8x128xf32>
    %252 = tpu.matmul %250, %251, %cst_129 {dimension_numbers = #tpu.dot_dimension_numbers<[1], [0], [0], [1], [0, 0, 1, 1], [], []>} : vector<8x32xf32>, vector<32x128xf32>, vector<8x128xf32> -> vector<8x128xf32>
    %253 = arith.addf %249, %252 : vector<8x128xf32>
    %254 = vector.extract_strided_slice %253 {offsets = [0, 0], sizes = [8, 32], strides = [1, 1]} : vector<8x128xf32> to vector<8x32xf32>
    %255 = arith.negf %254 : vector<8x32xf32>
    %256 = math.exp %255 : vector<8x32xf32>
    %cst_130 = arith.constant 1.000000e+00 : f32
    %257 = vector.broadcast %cst_130 : f32 to vector<8x32xf32>
    %258 = arith.addf %257, %256 : vector<8x32xf32>
    %259 = arith.divf %257, %258 : vector<8x32xf32>
    %260 = vector.extract_strided_slice %253 {offsets = [0, 32], sizes = [8, 32], strides = [1, 1]} : vector<8x128xf32> to vector<8x32xf32>
    %261 = arith.negf %260 : vector<8x32xf32>
    %262 = math.exp %261 : vector<8x32xf32>
    %cst_131 = arith.constant 1.000000e+00 : f32
    %263 = vector.broadcast %cst_131 : f32 to vector<8x32xf32>
    %264 = arith.addf %263, %262 : vector<8x32xf32>
    %265 = arith.divf %263, %264 : vector<8x32xf32>
    %266 = vector.extract_strided_slice %253 {offsets = [0, 64], sizes = [8, 32], strides = [1, 1]} : vector<8x128xf32> to vector<8x32xf32>
    %267 = math.tanh %266 : vector<8x32xf32>
    %268 = vector.extract_strided_slice %253 {offsets = [0, 96], sizes = [8, 32], strides = [1, 1]} : vector<8x128xf32> to vector<8x32xf32>
    %269 = arith.negf %268 : vector<8x32xf32>
    %270 = math.exp %269 : vector<8x32xf32>
    %cst_132 = arith.constant 1.000000e+00 : f32
    %271 = vector.broadcast %cst_132 : f32 to vector<8x32xf32>
    %272 = arith.addf %271, %270 : vector<8x32xf32>
    %273 = arith.divf %271, %272 : vector<8x32xf32>
    %c0_133 = arith.constant 0 : index
    %c0_134 = arith.constant 0 : index
    %274 = vector.load %arg13[%c0_133, %c0_134] : memref<8x32xf32, #tpu.memory_space<vmem>>, vector<8x32xf32>
    %275 = arith.mulf %265, %274 : vector<8x32xf32>
    %276 = arith.mulf %259, %267 : vector<8x32xf32>
    %277 = arith.addf %275, %276 : vector<8x32xf32>
    %278 = math.tanh %277 : vector<8x32xf32>
    %279 = arith.mulf %273, %278 : vector<8x32xf32>
    %c0_135 = arith.constant 0 : index
    %c0_136 = arith.constant 0 : index
    %280 = vector.load %arg13[%c0_135, %c0_136] : memref<8x32xf32, #tpu.memory_space<vmem>>, vector<8x32xf32>
    tpu.vector_store %arg13[%c0_135, %c0_136], %277 {strides = array<i32>} : memref<8x32xf32, #tpu.memory_space<vmem>>, vector<8x32xf32>,
    %c0_137 = arith.constant 0 : index
    %c0_138 = arith.constant 0 : index
    %281 = vector.load %arg12[%c0_137, %c0_138] : memref<8x32xf32, #tpu.memory_space<vmem>>, vector<8x32xf32>
    tpu.vector_store %arg12[%c0_137, %c0_138], %279 {strides = array<i32>} : memref<8x32xf32, #tpu.memory_space<vmem>>, vector<8x32xf32>,
    %282 = arith.index_cast %c6_i32 : i32 to index
    %c0_139 = arith.constant 0 : index
    %c0_140 = arith.constant 0 : index
    %283 = vector.load %arg10[%282, %c0_139, %c0_140] : memref<8x8x32xf32, #tpu.memory_space<vmem>>, vector<1x8x32xf32>
    %284 = vector.shape_cast %283 : vector<1x8x32xf32> to vector<8x32xf32>
    %285 = vector.shape_cast %279 : vector<8x32xf32> to vector<1x8x32xf32>
    tpu.vector_store %arg10[%282, %c0_139, %c0_140], %285 {strides = array<i32>} : memref<8x8x32xf32, #tpu.memory_space<vmem>>, vector<1x8x32xf32>,
    %c7_i32 = arith.constant 7 : i32
    %286 = arith.index_cast %c7_i32 : i32 to index
    %c0_141 = arith.constant 0 : index
    %c0_142 = arith.constant 0 : index
    %287 = vector.load %arg11[%286, %c0_141, %c0_142] : memref<8x8x128xf32, #tpu.memory_space<vmem>>, vector<1x8x128xf32>
    %288 = vector.shape_cast %287 : vector<1x8x128xf32> to vector<8x128xf32>
    %c0_143 = arith.constant 0 : index
    %c0_144 = arith.constant 0 : index
    %289 = vector.load %arg12[%c0_143, %c0_144] : memref<8x32xf32, #tpu.memory_space<vmem>>, vector<8x32xf32>
    %c0_145 = arith.constant 0 : index
    %c0_146 = arith.constant 0 : index
    %290 = vector.load %arg2[%c0_145, %c0_146] : memref<32x128xf32, #tpu.memory_space<vmem>>, vector<32x128xf32>
    %cst_147 = arith.constant dense<0.000000e+00> : vector<8x128xf32>
    %291 = tpu.matmul %289, %290, %cst_147 {dimension_numbers = #tpu.dot_dimension_numbers<[1], [0], [0], [1], [0, 0, 1, 1], [], []>} : vector<8x32xf32>, vector<32x128xf32>, vector<8x128xf32> -> vector<8x128xf32>
    %292 = arith.addf %288, %291 : vector<8x128xf32>
    %293 = vector.extract_strided_slice %292 {offsets = [0, 0], sizes = [8, 32], strides = [1, 1]} : vector<8x128xf32> to vector<8x32xf32>
    %294 = arith.negf %293 : vector<8x32xf32>
    %295 = math.exp %294 : vector<8x32xf32>
    %cst_148 = arith.constant 1.000000e+00 : f32
    %296 = vector.broadcast %cst_148 : f32 to vector<8x32xf32>
    %297 = arith.addf %296, %295 : vector<8x32xf32>
    %298 = arith.divf %296, %297 : vector<8x32xf32>
    %299 = vector.extract_strided_slice %292 {offsets = [0, 32], sizes = [8, 32], strides = [1, 1]} : vector<8x128xf32> to vector<8x32xf32>
    %300 = arith.negf %299 : vector<8x32xf32>
    %301 = math.exp %300 : vector<8x32xf32>
    %cst_149 = arith.constant 1.000000e+00 : f32
    %302 = vector.broadcast %cst_149 : f32 to vector<8x32xf32>
    %303 = arith.addf %302, %301 : vector<8x32xf32>
    %304 = arith.divf %302, %303 : vector<8x32xf32>
    %305 = vector.extract_strided_slice %292 {offsets = [0, 64], sizes = [8, 32], strides = [1, 1]} : vector<8x128xf32> to vector<8x32xf32>
    %306 = math.tanh %305 : vector<8x32xf32>
    %307 = vector.extract_strided_slice %292 {offsets = [0, 96], sizes = [8, 32], strides = [1, 1]} : vector<8x128xf32> to vector<8x32xf32>
    %308 = arith.negf %307 : vector<8x32xf32>
    %309 = math.exp %308 : vector<8x32xf32>
    %cst_150 = arith.constant 1.000000e+00 : f32
    %310 = vector.broadcast %cst_150 : f32 to vector<8x32xf32>
    %311 = arith.addf %310, %309 : vector<8x32xf32>
    %312 = arith.divf %310, %311 : vector<8x32xf32>
    %c0_151 = arith.constant 0 : index
    %c0_152 = arith.constant 0 : index
    %313 = vector.load %arg13[%c0_151, %c0_152] : memref<8x32xf32, #tpu.memory_space<vmem>>, vector<8x32xf32>
    %314 = arith.mulf %304, %313 : vector<8x32xf32>
    %315 = arith.mulf %298, %306 : vector<8x32xf32>
    %316 = arith.addf %314, %315 : vector<8x32xf32>
    %317 = math.tanh %316 : vector<8x32xf32>
    %318 = arith.mulf %312, %317 : vector<8x32xf32>
    %c0_153 = arith.constant 0 : index
    %c0_154 = arith.constant 0 : index
    %319 = vector.load %arg13[%c0_153, %c0_154] : memref<8x32xf32, #tpu.memory_space<vmem>>, vector<8x32xf32>
    tpu.vector_store %arg13[%c0_153, %c0_154], %316 {strides = array<i32>} : memref<8x32xf32, #tpu.memory_space<vmem>>, vector<8x32xf32>,
    %c0_155 = arith.constant 0 : index
    %c0_156 = arith.constant 0 : index
    %320 = vector.load %arg12[%c0_155, %c0_156] : memref<8x32xf32, #tpu.memory_space<vmem>>, vector<8x32xf32>
    tpu.vector_store %arg12[%c0_155, %c0_156], %318 {strides = array<i32>} : memref<8x32xf32, #tpu.memory_space<vmem>>, vector<8x32xf32>,
    %321 = arith.index_cast %c7_i32 : i32 to index
    %c0_157 = arith.constant 0 : index
    %c0_158 = arith.constant 0 : index
    %322 = vector.load %arg10[%321, %c0_157, %c0_158] : memref<8x8x32xf32, #tpu.memory_space<vmem>>, vector<1x8x32xf32>
    %323 = vector.shape_cast %322 : vector<1x8x32xf32> to vector<8x32xf32>
    %324 = vector.shape_cast %318 : vector<8x32xf32> to vector<1x8x32xf32>
    tpu.vector_store %arg10[%321, %c0_157, %c0_158], %324 {strides = array<i32>} : memref<8x8x32xf32, #tpu.memory_space<vmem>>, vector<1x8x32xf32>,
    %c8_i32 = arith.constant 8 : i32
    %c0_159 = arith.constant 0 : index
    %c0_160 = arith.constant 0 : index
    %c0_161 = arith.constant 0 : index
    %325 = vector.load %arg10[%c0_159, %c0_160, %c0_161] : memref<8x8x32xf32, #tpu.memory_space<vmem>>, vector<8x8x32xf32>
    %326 = vector.shape_cast %325 : vector<8x8x32xf32> to vector<64x32xf32>
    %c0_162 = arith.constant 0 : index
    %c0_163 = arith.constant 0 : index
    %327 = vector.load %arg4[%c0_162, %c0_163] : memref<32x128xf32, #tpu.memory_space<vmem>>, vector<32x128xf32>
    %cst_164 = arith.constant dense<0.000000e+00> : vector<64x128xf32>
    %328 = tpu.matmul %326, %327, %cst_164 {dimension_numbers = #tpu.dot_dimension_numbers<[1], [0], [0], [1], [0, 0, 1, 1], [], []>} : vector<64x32xf32>, vector<32x128xf32>, vector<64x128xf32> -> vector<64x128xf32>
    %c0_165 = arith.constant 0 : index
    %c0_166 = arith.constant 0 : index
    %329 = vector.load %arg6[%c0_165, %c0_166] : memref<1x128xf32, #tpu.memory_space<vmem>>, vector<1x128xf32>
    %330 = vector.broadcast %329 : vector<1x128xf32> to vector<64x128xf32>
    %331 = arith.addf %328, %330 : vector<64x128xf32>
    %332 = vector.shape_cast %331 : vector<64x128xf32> to vector<8x8x128xf32>
    %c0_167 = arith.constant 0 : index
    %c0_168 = arith.constant 0 : index
    %c0_169 = arith.constant 0 : index
    %333 = vector.load %arg11[%c0_167, %c0_168, %c0_169] : memref<8x8x128xf32, #tpu.memory_space<vmem>>, vector<8x8x128xf32>
    tpu.vector_store %arg11[%c0_167, %c0_168, %c0_169], %332 {strides = array<i32>} : memref<8x8x128xf32, #tpu.memory_space<vmem>>, vector<8x8x128xf32>,
    %cst_170 = arith.constant 0.000000e+00 : f32
    %334 = vector.broadcast %cst_170 : f32 to vector<8x32xf32>
    %c0_171 = arith.constant 0 : index
    %c0_172 = arith.constant 0 : index
    %335 = vector.load %arg12[%c0_171, %c0_172] : memref<8x32xf32, #tpu.memory_space<vmem>>, vector<8x32xf32>
    tpu.vector_store %arg12[%c0_171, %c0_172], %334 {strides = array<i32>} : memref<8x32xf32, #tpu.memory_space<vmem>>, vector<8x32xf32>,
    %cst_173 = arith.constant 0.000000e+00 : f32
    %336 = vector.broadcast %cst_173 : f32 to vector<8x32xf32>
    %c0_174 = arith.constant 0 : index
    %c0_175 = arith.constant 0 : index
    %337 = vector.load %arg13[%c0_174, %c0_175] : memref<8x32xf32, #tpu.memory_space<vmem>>, vector<8x32xf32>
    tpu.vector_store %arg13[%c0_174, %c0_175], %336 {strides = array<i32>} : memref<8x32xf32, #tpu.memory_space<vmem>>, vector<8x32xf32>,
    %c0_i32_176 = arith.constant 0 : i32
    %338 = arith.index_cast %c0_i32_176 : i32 to index
    %c0_177 = arith.constant 0 : index
    %c0_178 = arith.constant 0 : index
    %339 = vector.load %arg11[%338, %c0_177, %c0_178] : memref<8x8x128xf32, #tpu.memory_space<vmem>>, vector<1x8x128xf32>
    %340 = vector.shape_cast %339 : vector<1x8x128xf32> to vector<8x128xf32>
    %c0_179 = arith.constant 0 : index
    %c0_180 = arith.constant 0 : index
    %341 = vector.load %arg12[%c0_179, %c0_180] : memref<8x32xf32, #tpu.memory_space<vmem>>, vector<8x32xf32>
    %c0_181 = arith.constant 0 : index
    %c0_182 = arith.constant 0 : index
    %342 = vector.load %arg5[%c0_181, %c0_182] : memref<32x128xf32, #tpu.memory_space<vmem>>, vector<32x128xf32>
    %cst_183 = arith.constant dense<0.000000e+00> : vector<8x128xf32>
    %343 = tpu.matmul %341, %342, %cst_183 {dimension_numbers = #tpu.dot_dimension_numbers<[1], [0], [0], [1], [0, 0, 1, 1], [], []>} : vector<8x32xf32>, vector<32x128xf32>, vector<8x128xf32> -> vector<8x128xf32>
    %344 = arith.addf %340, %343 : vector<8x128xf32>
    %345 = vector.extract_strided_slice %344 {offsets = [0, 0], sizes = [8, 32], strides = [1, 1]} : vector<8x128xf32> to vector<8x32xf32>
    %346 = arith.negf %345 : vector<8x32xf32>
    %347 = math.exp %346 : vector<8x32xf32>
    %cst_184 = arith.constant 1.000000e+00 : f32
    %348 = vector.broadcast %cst_184 : f32 to vector<8x32xf32>
    %349 = arith.addf %348, %347 : vector<8x32xf32>
    %350 = arith.divf %348, %349 : vector<8x32xf32>
    %351 = vector.extract_strided_slice %344 {offsets = [0, 32], sizes = [8, 32], strides = [1, 1]} : vector<8x128xf32> to vector<8x32xf32>
    %352 = arith.negf %351 : vector<8x32xf32>
    %353 = math.exp %352 : vector<8x32xf32>
    %cst_185 = arith.constant 1.000000e+00 : f32
    %354 = vector.broadcast %cst_185 : f32 to vector<8x32xf32>
    %355 = arith.addf %354, %353 : vector<8x32xf32>
    %356 = arith.divf %354, %355 : vector<8x32xf32>
    %357 = vector.extract_strided_slice %344 {offsets = [0, 64], sizes = [8, 32], strides = [1, 1]} : vector<8x128xf32> to vector<8x32xf32>
    %358 = math.tanh %357 : vector<8x32xf32>
    %359 = vector.extract_strided_slice %344 {offsets = [0, 96], sizes = [8, 32], strides = [1, 1]} : vector<8x128xf32> to vector<8x32xf32>
    %360 = arith.negf %359 : vector<8x32xf32>
    %361 = math.exp %360 : vector<8x32xf32>
    %cst_186 = arith.constant 1.000000e+00 : f32
    %362 = vector.broadcast %cst_186 : f32 to vector<8x32xf32>
    %363 = arith.addf %362, %361 : vector<8x32xf32>
    %364 = arith.divf %362, %363 : vector<8x32xf32>
    %c0_187 = arith.constant 0 : index
    %c0_188 = arith.constant 0 : index
    %365 = vector.load %arg13[%c0_187, %c0_188] : memref<8x32xf32, #tpu.memory_space<vmem>>, vector<8x32xf32>
    %366 = arith.mulf %356, %365 : vector<8x32xf32>
    %367 = arith.mulf %350, %358 : vector<8x32xf32>
    %368 = arith.addf %366, %367 : vector<8x32xf32>
    %369 = math.tanh %368 : vector<8x32xf32>
    %370 = arith.mulf %364, %369 : vector<8x32xf32>
    %c0_189 = arith.constant 0 : index
    %c0_190 = arith.constant 0 : index
    %371 = vector.load %arg13[%c0_189, %c0_190] : memref<8x32xf32, #tpu.memory_space<vmem>>, vector<8x32xf32>
    tpu.vector_store %arg13[%c0_189, %c0_190], %368 {strides = array<i32>} : memref<8x32xf32, #tpu.memory_space<vmem>>, vector<8x32xf32>,
    %c0_191 = arith.constant 0 : index
    %c0_192 = arith.constant 0 : index
    %372 = vector.load %arg12[%c0_191, %c0_192] : memref<8x32xf32, #tpu.memory_space<vmem>>, vector<8x32xf32>
    tpu.vector_store %arg12[%c0_191, %c0_192], %370 {strides = array<i32>} : memref<8x32xf32, #tpu.memory_space<vmem>>, vector<8x32xf32>,
    %c1_i32_193 = arith.constant 1 : i32
    %373 = arith.index_cast %c1_i32_193 : i32 to index
    %c0_194 = arith.constant 0 : index
    %c0_195 = arith.constant 0 : index
    %374 = vector.load %arg11[%373, %c0_194, %c0_195] : memref<8x8x128xf32, #tpu.memory_space<vmem>>, vector<1x8x128xf32>
    %375 = vector.shape_cast %374 : vector<1x8x128xf32> to vector<8x128xf32>
    %c0_196 = arith.constant 0 : index
    %c0_197 = arith.constant 0 : index
    %376 = vector.load %arg12[%c0_196, %c0_197] : memref<8x32xf32, #tpu.memory_space<vmem>>, vector<8x32xf32>
    %c0_198 = arith.constant 0 : index
    %c0_199 = arith.constant 0 : index
    %377 = vector.load %arg5[%c0_198, %c0_199] : memref<32x128xf32, #tpu.memory_space<vmem>>, vector<32x128xf32>
    %cst_200 = arith.constant dense<0.000000e+00> : vector<8x128xf32>
    %378 = tpu.matmul %376, %377, %cst_200 {dimension_numbers = #tpu.dot_dimension_numbers<[1], [0], [0], [1], [0, 0, 1, 1], [], []>} : vector<8x32xf32>, vector<32x128xf32>, vector<8x128xf32> -> vector<8x128xf32>
    %379 = arith.addf %375, %378 : vector<8x128xf32>
    %380 = vector.extract_strided_slice %379 {offsets = [0, 0], sizes = [8, 32], strides = [1, 1]} : vector<8x128xf32> to vector<8x32xf32>
    %381 = arith.negf %380 : vector<8x32xf32>
    %382 = math.exp %381 : vector<8x32xf32>
    %cst_201 = arith.constant 1.000000e+00 : f32
    %383 = vector.broadcast %cst_201 : f32 to vector<8x32xf32>
    %384 = arith.addf %383, %382 : vector<8x32xf32>
    %385 = arith.divf %383, %384 : vector<8x32xf32>
    %386 = vector.extract_strided_slice %379 {offsets = [0, 32], sizes = [8, 32], strides = [1, 1]} : vector<8x128xf32> to vector<8x32xf32>
    %387 = arith.negf %386 : vector<8x32xf32>
    %388 = math.exp %387 : vector<8x32xf32>
    %cst_202 = arith.constant 1.000000e+00 : f32
    %389 = vector.broadcast %cst_202 : f32 to vector<8x32xf32>
    %390 = arith.addf %389, %388 : vector<8x32xf32>
    %391 = arith.divf %389, %390 : vector<8x32xf32>
    %392 = vector.extract_strided_slice %379 {offsets = [0, 64], sizes = [8, 32], strides = [1, 1]} : vector<8x128xf32> to vector<8x32xf32>
    %393 = math.tanh %392 : vector<8x32xf32>
    %394 = vector.extract_strided_slice %379 {offsets = [0, 96], sizes = [8, 32], strides = [1, 1]} : vector<8x128xf32> to vector<8x32xf32>
    %395 = arith.negf %394 : vector<8x32xf32>
    %396 = math.exp %395 : vector<8x32xf32>
    %cst_203 = arith.constant 1.000000e+00 : f32
    %397 = vector.broadcast %cst_203 : f32 to vector<8x32xf32>
    %398 = arith.addf %397, %396 : vector<8x32xf32>
    %399 = arith.divf %397, %398 : vector<8x32xf32>
    %c0_204 = arith.constant 0 : index
    %c0_205 = arith.constant 0 : index
    %400 = vector.load %arg13[%c0_204, %c0_205] : memref<8x32xf32, #tpu.memory_space<vmem>>, vector<8x32xf32>
    %401 = arith.mulf %391, %400 : vector<8x32xf32>
    %402 = arith.mulf %385, %393 : vector<8x32xf32>
    %403 = arith.addf %401, %402 : vector<8x32xf32>
    %404 = math.tanh %403 : vector<8x32xf32>
    %405 = arith.mulf %399, %404 : vector<8x32xf32>
    %c0_206 = arith.constant 0 : index
    %c0_207 = arith.constant 0 : index
    %406 = vector.load %arg13[%c0_206, %c0_207] : memref<8x32xf32, #tpu.memory_space<vmem>>, vector<8x32xf32>
    tpu.vector_store %arg13[%c0_206, %c0_207], %403 {strides = array<i32>} : memref<8x32xf32, #tpu.memory_space<vmem>>, vector<8x32xf32>,
    %c0_208 = arith.constant 0 : index
    %c0_209 = arith.constant 0 : index
    %407 = vector.load %arg12[%c0_208, %c0_209] : memref<8x32xf32, #tpu.memory_space<vmem>>, vector<8x32xf32>
    tpu.vector_store %arg12[%c0_208, %c0_209], %405 {strides = array<i32>} : memref<8x32xf32, #tpu.memory_space<vmem>>, vector<8x32xf32>,
    %c2_i32_210 = arith.constant 2 : i32
    %408 = arith.index_cast %c2_i32_210 : i32 to index
    %c0_211 = arith.constant 0 : index
    %c0_212 = arith.constant 0 : index
    %409 = vector.load %arg11[%408, %c0_211, %c0_212] : memref<8x8x128xf32, #tpu.memory_space<vmem>>, vector<1x8x128xf32>
    %410 = vector.shape_cast %409 : vector<1x8x128xf32> to vector<8x128xf32>
    %c0_213 = arith.constant 0 : index
    %c0_214 = arith.constant 0 : index
    %411 = vector.load %arg12[%c0_213, %c0_214] : memref<8x32xf32, #tpu.memory_space<vmem>>, vector<8x32xf32>
    %c0_215 = arith.constant 0 : index
    %c0_216 = arith.constant 0 : index
    %412 = vector.load %arg5[%c0_215, %c0_216] : memref<32x128xf32, #tpu.memory_space<vmem>>, vector<32x128xf32>
    %cst_217 = arith.constant dense<0.000000e+00> : vector<8x128xf32>
    %413 = tpu.matmul %411, %412, %cst_217 {dimension_numbers = #tpu.dot_dimension_numbers<[1], [0], [0], [1], [0, 0, 1, 1], [], []>} : vector<8x32xf32>, vector<32x128xf32>, vector<8x128xf32> -> vector<8x128xf32>
    %414 = arith.addf %410, %413 : vector<8x128xf32>
    %415 = vector.extract_strided_slice %414 {offsets = [0, 0], sizes = [8, 32], strides = [1, 1]} : vector<8x128xf32> to vector<8x32xf32>
    %416 = arith.negf %415 : vector<8x32xf32>
    %417 = math.exp %416 : vector<8x32xf32>
    %cst_218 = arith.constant 1.000000e+00 : f32
    %418 = vector.broadcast %cst_218 : f32 to vector<8x32xf32>
    %419 = arith.addf %418, %417 : vector<8x32xf32>
    %420 = arith.divf %418, %419 : vector<8x32xf32>
    %421 = vector.extract_strided_slice %414 {offsets = [0, 32], sizes = [8, 32], strides = [1, 1]} : vector<8x128xf32> to vector<8x32xf32>
    %422 = arith.negf %421 : vector<8x32xf32>
    %423 = math.exp %422 : vector<8x32xf32>
    %cst_219 = arith.constant 1.000000e+00 : f32
    %424 = vector.broadcast %cst_219 : f32 to vector<8x32xf32>
    %425 = arith.addf %424, %423 : vector<8x32xf32>
    %426 = arith.divf %424, %425 : vector<8x32xf32>
    %427 = vector.extract_strided_slice %414 {offsets = [0, 64], sizes = [8, 32], strides = [1, 1]} : vector<8x128xf32> to vector<8x32xf32>
    %428 = math.tanh %427 : vector<8x32xf32>
    %429 = vector.extract_strided_slice %414 {offsets = [0, 96], sizes = [8, 32], strides = [1, 1]} : vector<8x128xf32> to vector<8x32xf32>
    %430 = arith.negf %429 : vector<8x32xf32>
    %431 = math.exp %430 : vector<8x32xf32>
    %cst_220 = arith.constant 1.000000e+00 : f32
    %432 = vector.broadcast %cst_220 : f32 to vector<8x32xf32>
    %433 = arith.addf %432, %431 : vector<8x32xf32>
    %434 = arith.divf %432, %433 : vector<8x32xf32>
    %c0_221 = arith.constant 0 : index
    %c0_222 = arith.constant 0 : index
    %435 = vector.load %arg13[%c0_221, %c0_222] : memref<8x32xf32, #tpu.memory_space<vmem>>, vector<8x32xf32>
    %436 = arith.mulf %426, %435 : vector<8x32xf32>
    %437 = arith.mulf %420, %428 : vector<8x32xf32>
    %438 = arith.addf %436, %437 : vector<8x32xf32>
    %439 = math.tanh %438 : vector<8x32xf32>
    %440 = arith.mulf %434, %439 : vector<8x32xf32>
    %c0_223 = arith.constant 0 : index
    %c0_224 = arith.constant 0 : index
    %441 = vector.load %arg13[%c0_223, %c0_224] : memref<8x32xf32, #tpu.memory_space<vmem>>, vector<8x32xf32>
    tpu.vector_store %arg13[%c0_223, %c0_224], %438 {strides = array<i32>} : memref<8x32xf32, #tpu.memory_space<vmem>>, vector<8x32xf32>,
    %c0_225 = arith.constant 0 : index
    %c0_226 = arith.constant 0 : index
    %442 = vector.load %arg12[%c0_225, %c0_226] : memref<8x32xf32, #tpu.memory_space<vmem>>, vector<8x32xf32>
    tpu.vector_store %arg12[%c0_225, %c0_226], %440 {strides = array<i32>} : memref<8x32xf32, #tpu.memory_space<vmem>>, vector<8x32xf32>,
    %c3_i32_227 = arith.constant 3 : i32
    %443 = arith.index_cast %c3_i32_227 : i32 to index
    %c0_228 = arith.constant 0 : index
    %c0_229 = arith.constant 0 : index
    %444 = vector.load %arg11[%443, %c0_228, %c0_229] : memref<8x8x128xf32, #tpu.memory_space<vmem>>, vector<1x8x128xf32>
    %445 = vector.shape_cast %444 : vector<1x8x128xf32> to vector<8x128xf32>
    %c0_230 = arith.constant 0 : index
    %c0_231 = arith.constant 0 : index
    %446 = vector.load %arg12[%c0_230, %c0_231] : memref<8x32xf32, #tpu.memory_space<vmem>>, vector<8x32xf32>
    %c0_232 = arith.constant 0 : index
    %c0_233 = arith.constant 0 : index
    %447 = vector.load %arg5[%c0_232, %c0_233] : memref<32x128xf32, #tpu.memory_space<vmem>>, vector<32x128xf32>
    %cst_234 = arith.constant dense<0.000000e+00> : vector<8x128xf32>
    %448 = tpu.matmul %446, %447, %cst_234 {dimension_numbers = #tpu.dot_dimension_numbers<[1], [0], [0], [1], [0, 0, 1, 1], [], []>} : vector<8x32xf32>, vector<32x128xf32>, vector<8x128xf32> -> vector<8x128xf32>
    %449 = arith.addf %445, %448 : vector<8x128xf32>
    %450 = vector.extract_strided_slice %449 {offsets = [0, 0], sizes = [8, 32], strides = [1, 1]} : vector<8x128xf32> to vector<8x32xf32>
    %451 = arith.negf %450 : vector<8x32xf32>
    %452 = math.exp %451 : vector<8x32xf32>
    %cst_235 = arith.constant 1.000000e+00 : f32
    %453 = vector.broadcast %cst_235 : f32 to vector<8x32xf32>
    %454 = arith.addf %453, %452 : vector<8x32xf32>
    %455 = arith.divf %453, %454 : vector<8x32xf32>
    %456 = vector.extract_strided_slice %449 {offsets = [0, 32], sizes = [8, 32], strides = [1, 1]} : vector<8x128xf32> to vector<8x32xf32>
    %457 = arith.negf %456 : vector<8x32xf32>
    %458 = math.exp %457 : vector<8x32xf32>
    %cst_236 = arith.constant 1.000000e+00 : f32
    %459 = vector.broadcast %cst_236 : f32 to vector<8x32xf32>
    %460 = arith.addf %459, %458 : vector<8x32xf32>
    %461 = arith.divf %459, %460 : vector<8x32xf32>
    %462 = vector.extract_strided_slice %449 {offsets = [0, 64], sizes = [8, 32], strides = [1, 1]} : vector<8x128xf32> to vector<8x32xf32>
    %463 = math.tanh %462 : vector<8x32xf32>
    %464 = vector.extract_strided_slice %449 {offsets = [0, 96], sizes = [8, 32], strides = [1, 1]} : vector<8x128xf32> to vector<8x32xf32>
    %465 = arith.negf %464 : vector<8x32xf32>
    %466 = math.exp %465 : vector<8x32xf32>
    %cst_237 = arith.constant 1.000000e+00 : f32
    %467 = vector.broadcast %cst_237 : f32 to vector<8x32xf32>
    %468 = arith.addf %467, %466 : vector<8x32xf32>
    %469 = arith.divf %467, %468 : vector<8x32xf32>
    %c0_238 = arith.constant 0 : index
    %c0_239 = arith.constant 0 : index
    %470 = vector.load %arg13[%c0_238, %c0_239] : memref<8x32xf32, #tpu.memory_space<vmem>>, vector<8x32xf32>
    %471 = arith.mulf %461, %470 : vector<8x32xf32>
    %472 = arith.mulf %455, %463 : vector<8x32xf32>
    %473 = arith.addf %471, %472 : vector<8x32xf32>
    %474 = math.tanh %473 : vector<8x32xf32>
    %475 = arith.mulf %469, %474 : vector<8x32xf32>
    %c0_240 = arith.constant 0 : index
    %c0_241 = arith.constant 0 : index
    %476 = vector.load %arg13[%c0_240, %c0_241] : memref<8x32xf32, #tpu.memory_space<vmem>>, vector<8x32xf32>
    tpu.vector_store %arg13[%c0_240, %c0_241], %473 {strides = array<i32>} : memref<8x32xf32, #tpu.memory_space<vmem>>, vector<8x32xf32>,
    %c0_242 = arith.constant 0 : index
    %c0_243 = arith.constant 0 : index
    %477 = vector.load %arg12[%c0_242, %c0_243] : memref<8x32xf32, #tpu.memory_space<vmem>>, vector<8x32xf32>
    tpu.vector_store %arg12[%c0_242, %c0_243], %475 {strides = array<i32>} : memref<8x32xf32, #tpu.memory_space<vmem>>, vector<8x32xf32>,
    %c4_i32_244 = arith.constant 4 : i32
    %478 = arith.index_cast %c4_i32_244 : i32 to index
    %c0_245 = arith.constant 0 : index
    %c0_246 = arith.constant 0 : index
    %479 = vector.load %arg11[%478, %c0_245, %c0_246] : memref<8x8x128xf32, #tpu.memory_space<vmem>>, vector<1x8x128xf32>
    %480 = vector.shape_cast %479 : vector<1x8x128xf32> to vector<8x128xf32>
    %c0_247 = arith.constant 0 : index
    %c0_248 = arith.constant 0 : index
    %481 = vector.load %arg12[%c0_247, %c0_248] : memref<8x32xf32, #tpu.memory_space<vmem>>, vector<8x32xf32>
    %c0_249 = arith.constant 0 : index
    %c0_250 = arith.constant 0 : index
    %482 = vector.load %arg5[%c0_249, %c0_250] : memref<32x128xf32, #tpu.memory_space<vmem>>, vector<32x128xf32>
    %cst_251 = arith.constant dense<0.000000e+00> : vector<8x128xf32>
    %483 = tpu.matmul %481, %482, %cst_251 {dimension_numbers = #tpu.dot_dimension_numbers<[1], [0], [0], [1], [0, 0, 1, 1], [], []>} : vector<8x32xf32>, vector<32x128xf32>, vector<8x128xf32> -> vector<8x128xf32>
    %484 = arith.addf %480, %483 : vector<8x128xf32>
    %485 = vector.extract_strided_slice %484 {offsets = [0, 0], sizes = [8, 32], strides = [1, 1]} : vector<8x128xf32> to vector<8x32xf32>
    %486 = arith.negf %485 : vector<8x32xf32>
    %487 = math.exp %486 : vector<8x32xf32>
    %cst_252 = arith.constant 1.000000e+00 : f32
    %488 = vector.broadcast %cst_252 : f32 to vector<8x32xf32>
    %489 = arith.addf %488, %487 : vector<8x32xf32>
    %490 = arith.divf %488, %489 : vector<8x32xf32>
    %491 = vector.extract_strided_slice %484 {offsets = [0, 32], sizes = [8, 32], strides = [1, 1]} : vector<8x128xf32> to vector<8x32xf32>
    %492 = arith.negf %491 : vector<8x32xf32>
    %493 = math.exp %492 : vector<8x32xf32>
    %cst_253 = arith.constant 1.000000e+00 : f32
    %494 = vector.broadcast %cst_253 : f32 to vector<8x32xf32>
    %495 = arith.addf %494, %493 : vector<8x32xf32>
    %496 = arith.divf %494, %495 : vector<8x32xf32>
    %497 = vector.extract_strided_slice %484 {offsets = [0, 64], sizes = [8, 32], strides = [1, 1]} : vector<8x128xf32> to vector<8x32xf32>
    %498 = math.tanh %497 : vector<8x32xf32>
    %499 = vector.extract_strided_slice %484 {offsets = [0, 96], sizes = [8, 32], strides = [1, 1]} : vector<8x128xf32> to vector<8x32xf32>
    %500 = arith.negf %499 : vector<8x32xf32>
    %501 = math.exp %500 : vector<8x32xf32>
    %cst_254 = arith.constant 1.000000e+00 : f32
    %502 = vector.broadcast %cst_254 : f32 to vector<8x32xf32>
    %503 = arith.addf %502, %501 : vector<8x32xf32>
    %504 = arith.divf %502, %503 : vector<8x32xf32>
    %c0_255 = arith.constant 0 : index
    %c0_256 = arith.constant 0 : index
    %505 = vector.load %arg13[%c0_255, %c0_256] : memref<8x32xf32, #tpu.memory_space<vmem>>, vector<8x32xf32>
    %506 = arith.mulf %496, %505 : vector<8x32xf32>
    %507 = arith.mulf %490, %498 : vector<8x32xf32>
    %508 = arith.addf %506, %507 : vector<8x32xf32>
    %509 = math.tanh %508 : vector<8x32xf32>
    %510 = arith.mulf %504, %509 : vector<8x32xf32>
    %c0_257 = arith.constant 0 : index
    %c0_258 = arith.constant 0 : index
    %511 = vector.load %arg13[%c0_257, %c0_258] : memref<8x32xf32, #tpu.memory_space<vmem>>, vector<8x32xf32>
    tpu.vector_store %arg13[%c0_257, %c0_258], %508 {strides = array<i32>} : memref<8x32xf32, #tpu.memory_space<vmem>>, vector<8x32xf32>,
    %c0_259 = arith.constant 0 : index
    %c0_260 = arith.constant 0 : index
    %512 = vector.load %arg12[%c0_259, %c0_260] : memref<8x32xf32, #tpu.memory_space<vmem>>, vector<8x32xf32>
    tpu.vector_store %arg12[%c0_259, %c0_260], %510 {strides = array<i32>} : memref<8x32xf32, #tpu.memory_space<vmem>>, vector<8x32xf32>,
    %c5_i32_261 = arith.constant 5 : i32
    %513 = arith.index_cast %c5_i32_261 : i32 to index
    %c0_262 = arith.constant 0 : index
    %c0_263 = arith.constant 0 : index
    %514 = vector.load %arg11[%513, %c0_262, %c0_263] : memref<8x8x128xf32, #tpu.memory_space<vmem>>, vector<1x8x128xf32>
    %515 = vector.shape_cast %514 : vector<1x8x128xf32> to vector<8x128xf32>
    %c0_264 = arith.constant 0 : index
    %c0_265 = arith.constant 0 : index
    %516 = vector.load %arg12[%c0_264, %c0_265] : memref<8x32xf32, #tpu.memory_space<vmem>>, vector<8x32xf32>
    %c0_266 = arith.constant 0 : index
    %c0_267 = arith.constant 0 : index
    %517 = vector.load %arg5[%c0_266, %c0_267] : memref<32x128xf32, #tpu.memory_space<vmem>>, vector<32x128xf32>
    %cst_268 = arith.constant dense<0.000000e+00> : vector<8x128xf32>
    %518 = tpu.matmul %516, %517, %cst_268 {dimension_numbers = #tpu.dot_dimension_numbers<[1], [0], [0], [1], [0, 0, 1, 1], [], []>} : vector<8x32xf32>, vector<32x128xf32>, vector<8x128xf32> -> vector<8x128xf32>
    %519 = arith.addf %515, %518 : vector<8x128xf32>
    %520 = vector.extract_strided_slice %519 {offsets = [0, 0], sizes = [8, 32], strides = [1, 1]} : vector<8x128xf32> to vector<8x32xf32>
    %521 = arith.negf %520 : vector<8x32xf32>
    %522 = math.exp %521 : vector<8x32xf32>
    %cst_269 = arith.constant 1.000000e+00 : f32
    %523 = vector.broadcast %cst_269 : f32 to vector<8x32xf32>
    %524 = arith.addf %523, %522 : vector<8x32xf32>
    %525 = arith.divf %523, %524 : vector<8x32xf32>
    %526 = vector.extract_strided_slice %519 {offsets = [0, 32], sizes = [8, 32], strides = [1, 1]} : vector<8x128xf32> to vector<8x32xf32>
    %527 = arith.negf %526 : vector<8x32xf32>
    %528 = math.exp %527 : vector<8x32xf32>
    %cst_270 = arith.constant 1.000000e+00 : f32
    %529 = vector.broadcast %cst_270 : f32 to vector<8x32xf32>
    %530 = arith.addf %529, %528 : vector<8x32xf32>
    %531 = arith.divf %529, %530 : vector<8x32xf32>
    %532 = vector.extract_strided_slice %519 {offsets = [0, 64], sizes = [8, 32], strides = [1, 1]} : vector<8x128xf32> to vector<8x32xf32>
    %533 = math.tanh %532 : vector<8x32xf32>
    %534 = vector.extract_strided_slice %519 {offsets = [0, 96], sizes = [8, 32], strides = [1, 1]} : vector<8x128xf32> to vector<8x32xf32>
    %535 = arith.negf %534 : vector<8x32xf32>
    %536 = math.exp %535 : vector<8x32xf32>
    %cst_271 = arith.constant 1.000000e+00 : f32
    %537 = vector.broadcast %cst_271 : f32 to vector<8x32xf32>
    %538 = arith.addf %537, %536 : vector<8x32xf32>
    %539 = arith.divf %537, %538 : vector<8x32xf32>
    %c0_272 = arith.constant 0 : index
    %c0_273 = arith.constant 0 : index
    %540 = vector.load %arg13[%c0_272, %c0_273] : memref<8x32xf32, #tpu.memory_space<vmem>>, vector<8x32xf32>
    %541 = arith.mulf %531, %540 : vector<8x32xf32>
    %542 = arith.mulf %525, %533 : vector<8x32xf32>
    %543 = arith.addf %541, %542 : vector<8x32xf32>
    %544 = math.tanh %543 : vector<8x32xf32>
    %545 = arith.mulf %539, %544 : vector<8x32xf32>
    %c0_274 = arith.constant 0 : index
    %c0_275 = arith.constant 0 : index
    %546 = vector.load %arg13[%c0_274, %c0_275] : memref<8x32xf32, #tpu.memory_space<vmem>>, vector<8x32xf32>
    tpu.vector_store %arg13[%c0_274, %c0_275], %543 {strides = array<i32>} : memref<8x32xf32, #tpu.memory_space<vmem>>, vector<8x32xf32>,
    %c0_276 = arith.constant 0 : index
    %c0_277 = arith.constant 0 : index
    %547 = vector.load %arg12[%c0_276, %c0_277] : memref<8x32xf32, #tpu.memory_space<vmem>>, vector<8x32xf32>
    tpu.vector_store %arg12[%c0_276, %c0_277], %545 {strides = array<i32>} : memref<8x32xf32, #tpu.memory_space<vmem>>, vector<8x32xf32>,
    %c6_i32_278 = arith.constant 6 : i32
    %548 = arith.index_cast %c6_i32_278 : i32 to index
    %c0_279 = arith.constant 0 : index
    %c0_280 = arith.constant 0 : index
    %549 = vector.load %arg11[%548, %c0_279, %c0_280] : memref<8x8x128xf32, #tpu.memory_space<vmem>>, vector<1x8x128xf32>
    %550 = vector.shape_cast %549 : vector<1x8x128xf32> to vector<8x128xf32>
    %c0_281 = arith.constant 0 : index
    %c0_282 = arith.constant 0 : index
    %551 = vector.load %arg12[%c0_281, %c0_282] : memref<8x32xf32, #tpu.memory_space<vmem>>, vector<8x32xf32>
    %c0_283 = arith.constant 0 : index
    %c0_284 = arith.constant 0 : index
    %552 = vector.load %arg5[%c0_283, %c0_284] : memref<32x128xf32, #tpu.memory_space<vmem>>, vector<32x128xf32>
    %cst_285 = arith.constant dense<0.000000e+00> : vector<8x128xf32>
    %553 = tpu.matmul %551, %552, %cst_285 {dimension_numbers = #tpu.dot_dimension_numbers<[1], [0], [0], [1], [0, 0, 1, 1], [], []>} : vector<8x32xf32>, vector<32x128xf32>, vector<8x128xf32> -> vector<8x128xf32>
    %554 = arith.addf %550, %553 : vector<8x128xf32>
    %555 = vector.extract_strided_slice %554 {offsets = [0, 0], sizes = [8, 32], strides = [1, 1]} : vector<8x128xf32> to vector<8x32xf32>
    %556 = arith.negf %555 : vector<8x32xf32>
    %557 = math.exp %556 : vector<8x32xf32>
    %cst_286 = arith.constant 1.000000e+00 : f32
    %558 = vector.broadcast %cst_286 : f32 to vector<8x32xf32>
    %559 = arith.addf %558, %557 : vector<8x32xf32>
    %560 = arith.divf %558, %559 : vector<8x32xf32>
    %561 = vector.extract_strided_slice %554 {offsets = [0, 32], sizes = [8, 32], strides = [1, 1]} : vector<8x128xf32> to vector<8x32xf32>
    %562 = arith.negf %561 : vector<8x32xf32>
    %563 = math.exp %562 : vector<8x32xf32>
    %cst_287 = arith.constant 1.000000e+00 : f32
    %564 = vector.broadcast %cst_287 : f32 to vector<8x32xf32>
    %565 = arith.addf %564, %563 : vector<8x32xf32>
    %566 = arith.divf %564, %565 : vector<8x32xf32>
    %567 = vector.extract_strided_slice %554 {offsets = [0, 64], sizes = [8, 32], strides = [1, 1]} : vector<8x128xf32> to vector<8x32xf32>
    %568 = math.tanh %567 : vector<8x32xf32>
    %569 = vector.extract_strided_slice %554 {offsets = [0, 96], sizes = [8, 32], strides = [1, 1]} : vector<8x128xf32> to vector<8x32xf32>
    %570 = arith.negf %569 : vector<8x32xf32>
    %571 = math.exp %570 : vector<8x32xf32>
    %cst_288 = arith.constant 1.000000e+00 : f32
    %572 = vector.broadcast %cst_288 : f32 to vector<8x32xf32>
    %573 = arith.addf %572, %571 : vector<8x32xf32>
    %574 = arith.divf %572, %573 : vector<8x32xf32>
    %c0_289 = arith.constant 0 : index
    %c0_290 = arith.constant 0 : index
    %575 = vector.load %arg13[%c0_289, %c0_290] : memref<8x32xf32, #tpu.memory_space<vmem>>, vector<8x32xf32>
    %576 = arith.mulf %566, %575 : vector<8x32xf32>
    %577 = arith.mulf %560, %568 : vector<8x32xf32>
    %578 = arith.addf %576, %577 : vector<8x32xf32>
    %579 = math.tanh %578 : vector<8x32xf32>
    %580 = arith.mulf %574, %579 : vector<8x32xf32>
    %c0_291 = arith.constant 0 : index
    %c0_292 = arith.constant 0 : index
    %581 = vector.load %arg13[%c0_291, %c0_292] : memref<8x32xf32, #tpu.memory_space<vmem>>, vector<8x32xf32>
    tpu.vector_store %arg13[%c0_291, %c0_292], %578 {strides = array<i32>} : memref<8x32xf32, #tpu.memory_space<vmem>>, vector<8x32xf32>,
    %c0_293 = arith.constant 0 : index
    %c0_294 = arith.constant 0 : index
    %582 = vector.load %arg12[%c0_293, %c0_294] : memref<8x32xf32, #tpu.memory_space<vmem>>, vector<8x32xf32>
    tpu.vector_store %arg12[%c0_293, %c0_294], %580 {strides = array<i32>} : memref<8x32xf32, #tpu.memory_space<vmem>>, vector<8x32xf32>,
    %c7_i32_295 = arith.constant 7 : i32
    %583 = arith.index_cast %c7_i32_295 : i32 to index
    %c0_296 = arith.constant 0 : index
    %c0_297 = arith.constant 0 : index
    %584 = vector.load %arg11[%583, %c0_296, %c0_297] : memref<8x8x128xf32, #tpu.memory_space<vmem>>, vector<1x8x128xf32>
    %585 = vector.shape_cast %584 : vector<1x8x128xf32> to vector<8x128xf32>
    %c0_298 = arith.constant 0 : index
    %c0_299 = arith.constant 0 : index
    %586 = vector.load %arg12[%c0_298, %c0_299] : memref<8x32xf32, #tpu.memory_space<vmem>>, vector<8x32xf32>
    %c0_300 = arith.constant 0 : index
    %c0_301 = arith.constant 0 : index
    %587 = vector.load %arg5[%c0_300, %c0_301] : memref<32x128xf32, #tpu.memory_space<vmem>>, vector<32x128xf32>
    %cst_302 = arith.constant dense<0.000000e+00> : vector<8x128xf32>
    %588 = tpu.matmul %586, %587, %cst_302 {dimension_numbers = #tpu.dot_dimension_numbers<[1], [0], [0], [1], [0, 0, 1, 1], [], []>} : vector<8x32xf32>, vector<32x128xf32>, vector<8x128xf32> -> vector<8x128xf32>
    %589 = arith.addf %585, %588 : vector<8x128xf32>
    %590 = vector.extract_strided_slice %589 {offsets = [0, 0], sizes = [8, 32], strides = [1, 1]} : vector<8x128xf32> to vector<8x32xf32>
    %591 = arith.negf %590 : vector<8x32xf32>
    %592 = math.exp %591 : vector<8x32xf32>
    %cst_303 = arith.constant 1.000000e+00 : f32
    %593 = vector.broadcast %cst_303 : f32 to vector<8x32xf32>
    %594 = arith.addf %593, %592 : vector<8x32xf32>
    %595 = arith.divf %593, %594 : vector<8x32xf32>
    %596 = vector.extract_strided_slice %589 {offsets = [0, 32], sizes = [8, 32], strides = [1, 1]} : vector<8x128xf32> to vector<8x32xf32>
    %597 = arith.negf %596 : vector<8x32xf32>
    %598 = math.exp %597 : vector<8x32xf32>
    %cst_304 = arith.constant 1.000000e+00 : f32
    %599 = vector.broadcast %cst_304 : f32 to vector<8x32xf32>
    %600 = arith.addf %599, %598 : vector<8x32xf32>
    %601 = arith.divf %599, %600 : vector<8x32xf32>
    %602 = vector.extract_strided_slice %589 {offsets = [0, 64], sizes = [8, 32], strides = [1, 1]} : vector<8x128xf32> to vector<8x32xf32>
    %603 = math.tanh %602 : vector<8x32xf32>
    %604 = vector.extract_strided_slice %589 {offsets = [0, 96], sizes = [8, 32], strides = [1, 1]} : vector<8x128xf32> to vector<8x32xf32>
    %605 = arith.negf %604 : vector<8x32xf32>
    %606 = math.exp %605 : vector<8x32xf32>
    %cst_305 = arith.constant 1.000000e+00 : f32
    %607 = vector.broadcast %cst_305 : f32 to vector<8x32xf32>
    %608 = arith.addf %607, %606 : vector<8x32xf32>
    %609 = arith.divf %607, %608 : vector<8x32xf32>
    %c0_306 = arith.constant 0 : index
    %c0_307 = arith.constant 0 : index
    %610 = vector.load %arg13[%c0_306, %c0_307] : memref<8x32xf32, #tpu.memory_space<vmem>>, vector<8x32xf32>
    %611 = arith.mulf %601, %610 : vector<8x32xf32>
    %612 = arith.mulf %595, %603 : vector<8x32xf32>
    %613 = arith.addf %611, %612 : vector<8x32xf32>
    %614 = math.tanh %613 : vector<8x32xf32>
    %615 = arith.mulf %609, %614 : vector<8x32xf32>
    %c0_308 = arith.constant 0 : index
    %c0_309 = arith.constant 0 : index
    %616 = vector.load %arg13[%c0_308, %c0_309] : memref<8x32xf32, #tpu.memory_space<vmem>>, vector<8x32xf32>
    tpu.vector_store %arg13[%c0_308, %c0_309], %613 {strides = array<i32>} : memref<8x32xf32, #tpu.memory_space<vmem>>, vector<8x32xf32>,
    %c0_310 = arith.constant 0 : index
    %c0_311 = arith.constant 0 : index
    %617 = vector.load %arg12[%c0_310, %c0_311] : memref<8x32xf32, #tpu.memory_space<vmem>>, vector<8x32xf32>
    tpu.vector_store %arg12[%c0_310, %c0_311], %615 {strides = array<i32>} : memref<8x32xf32, #tpu.memory_space<vmem>>, vector<8x32xf32>,
    %c8_i32_312 = arith.constant 8 : i32
    %c0_313 = arith.constant 0 : index
    %c0_314 = arith.constant 0 : index
    %618 = vector.load %arg12[%c0_313, %c0_314] : memref<8x32xf32, #tpu.memory_space<vmem>>, vector<8x32xf32>
    %c0_315 = arith.constant 0 : index
    %c0_316 = arith.constant 0 : index
    %619 = vector.load %arg7[%c0_315, %c0_316] : memref<32x1xf32, #tpu.memory_space<vmem>>, vector<32x1xf32>
    %cst_317 = arith.constant dense<0.000000e+00> : vector<8x1xf32>
    %620 = tpu.matmul %618, %619, %cst_317 {dimension_numbers = #tpu.dot_dimension_numbers<[1], [0], [0], [1], [0, 0, 1, 1], [], []>} : vector<8x32xf32>, vector<32x1xf32>, vector<8x1xf32> -> vector<8x1xf32>
    %c0_318 = arith.constant 0 : index
    %c0_319 = arith.constant 0 : index
    %621 = vector.load %arg8[%c0_318, %c0_319] : memref<1x1xf32, #tpu.memory_space<vmem>>, vector<1x1xf32>
    %622 = vector.broadcast %621 : vector<1x1xf32> to vector<8x1xf32>
    %623 = arith.addf %620, %622 : vector<8x1xf32>
    %c0_320 = arith.constant 0 : index
    %c0_321 = arith.constant 0 : index
    %624 = vector.load %arg9[%c0_320, %c0_321] : memref<8x1xf32, #tpu.memory_space<vmem>>, vector<8x1xf32>
    tpu.vector_store %arg9[%c0_320, %c0_321], %623 {strides = array<i32>} : memref<8x1xf32, #tpu.memory_space<vmem>>, vector<8x1xf32>,
    return
  }
}

</mosaic_0001>

<llo_original>
// kernel: lstm_aqi_forward.1
$region0: #{lstm_aqi_forward.1}
  #allocation0 [shape = 'u32[]', space=smem, size = 0x4, offset = 0x4, fixed_abs, tag = 'smem constant byte address 0x4 - core index']
  #allocation1 [shape = 'u32[72,128]{1,0:T(1,128)}', space=vmem, size = 0x9000, scoped, tag = 'internal scratch']
  #allocation2 [shape = 'f32[8,8,32]{2,1,0:T(8,128)}', space=vmem, size = 0x8000, scoped, tag = 'scratch operand']
  #allocation3 [shape = 'f32[8,8,128]{2,1,0:T(8,128)}', space=vmem, size = 0x8000, scoped, tag = 'scratch operand']
  #allocation4 [shape = 'f32[8,32]{1,0:T(8,128)}', space=vmem, size = 0x1000, scoped, tag = 'scratch operand']
  #allocation5 [shape = 'f32[8,32]{1,0:T(8,128)}', space=vmem, size = 0x1000, scoped, tag = 'scratch operand']
  #allocation6 [shape = 'f32[1,1]{1,0:T(1,128)S(1)}', space=vmem, size = 0x200, scoped, tag = 'scoped memory for lstm_aqi_forward.1']
  %s0 = inlined_call_operand.vmem [shape: f32[8,8,4], index: 0, kind: input, shape index: {}]
  %s1 = inlined_call_operand.vmem [shape: f32[4,128], index: 1, kind: input, shape index: {}]
  %s2 = inlined_call_operand.vmem [shape: f32[32,128], index: 2, kind: input, shape index: {}]
  %s3 = inlined_call_operand.vmem [shape: f32[1,128], index: 3, kind: input, shape index: {}]
  %s4 = inlined_call_operand.vmem [shape: f32[32,128], index: 4, kind: input, shape index: {}]
  %s5 = inlined_call_operand.vmem [shape: f32[32,128], index: 5, kind: input, shape index: {}]
  %s6 = inlined_call_operand.vmem [shape: f32[1,128], index: 6, kind: input, shape index: {}]
  %s7 = inlined_call_operand.vmem [shape: f32[32,1], index: 7, kind: input, shape index: {}]
  %s8 = inlined_call_operand.<no memory space> [shape: f32[1,1], index: 8, kind: input, shape index: {}]
  %s9 = inlined_call_operand.vmem [shape: f32[8,1], index: 9, kind: output, shape index: {}]
  %s10 = sld [smem:[#allocation0]]
  $region46: #{lstm_aqi_forward.1} parent=0
    _
  %s12 = ssub.s32 1, %s10
  %s13 = scalar_select 0, %s12, %s10
  %v14 = vstv %s8
  %15 = vst [vmem:[#allocation6] sm:$0x1] %v14
  // Predicated region
  $region2: #{lstm_aqi_forward.1} parent=0 // pred_check
    _
  $region3: #{lstm_aqi_forward.1} parent=0 // pred_check_branch
    %17 = sbr.rel (0) target = $region5
  $region4: #{lstm_aqi_forward.1} parent=0 // pred_region
    _
  $region5: #{lstm_aqi_forward.1} parent=0 // pred_fallthru
    _
  // Predicated region
  $region6: #{lstm_aqi_forward.1} parent=0 // pred_check
    _
  $region7: #{lstm_aqi_forward.1} parent=0 // pred_check_branch
    %19 = sbr.rel (0) target = $region9
  $region8: #{lstm_aqi_forward.1} parent=0 // pred_region
    _
  $region9: #{lstm_aqi_forward.1} parent=0 // pred_fallthru
    _
  // Predicated region
  $region10: #{lstm_aqi_forward.1} parent=0 // pred_check
    _
  $region11: #{lstm_aqi_forward.1} parent=0 // pred_check_branch
    %21 = sbr.rel (0) target = $region13
  $region12: #{lstm_aqi_forward.1} parent=0 // pred_region
    _
  $region13: #{lstm_aqi_forward.1} parent=0 // pred_fallthru
    _
  // Predicated region
  $region14: #{lstm_aqi_forward.1} parent=0 // pred_check
    _
  $region15: #{lstm_aqi_forward.1} parent=0 // pred_check_branch
    %23 = sbr.rel (0) target = $region17
  $region16: #{lstm_aqi_forward.1} parent=0 // pred_region
    _
  $region17: #{lstm_aqi_forward.1} parent=0 // pred_fallthru
    _
  // Predicated region
  $region18: #{lstm_aqi_forward.1} parent=0 // pred_check
    _
  $region19: #{lstm_aqi_forward.1} parent=0 // pred_check_branch
    %25 = sbr.rel (0) target = $region21
  $region20: #{lstm_aqi_forward.1} parent=0 // pred_region
    _
  $region21: #{lstm_aqi_forward.1} parent=0 // pred_fallthru
    _
  // Predicated region
  $region22: #{lstm_aqi_forward.1} parent=0 // pred_check
    _
  $region23: #{lstm_aqi_forward.1} parent=0 // pred_check_branch
    %27 = sbr.rel (0) target = $region25
  $region24: #{lstm_aqi_forward.1} parent=0 // pred_region
    _
  $region25: #{lstm_aqi_forward.1} parent=0 // pred_fallthru
    _
  // Predicated region
  $region26: #{lstm_aqi_forward.1} parent=0 // pred_check
    _
  $region27: #{lstm_aqi_forward.1} parent=0 // pred_check_branch
    %29 = sbr.rel (0) target = $region29
  $region28: #{lstm_aqi_forward.1} parent=0 // pred_region
    _
  $region29: #{lstm_aqi_forward.1} parent=0 // pred_fallthru
    _
  // Predicated region
  $region30: #{lstm_aqi_forward.1} parent=0 // pred_check
    _
  $region31: #{lstm_aqi_forward.1} parent=0 // pred_check_branch
    %31 = sbr.rel (0) target = $region33
  $region32: #{lstm_aqi_forward.1} parent=0 // pred_region
    _
  $region33: #{lstm_aqi_forward.1} parent=0 // pred_fallthru
    _
  // Predicated region
  $region34: #{lstm_aqi_forward.1} parent=0 // pred_check
    _
  $region35: #{lstm_aqi_forward.1} parent=0 // pred_check_branch
    %33 = sbr.rel (0) target = $region37
  $region36: #{lstm_aqi_forward.1} parent=0 // pred_region
    _
  $region37: #{lstm_aqi_forward.1} parent=0 // pred_fallthru
    _
  %v34 = vld [vmem:[%s0] sm:$0xff]
  %v35 = vld [vmem:[%s0 + $0x8] sm:$0xff]
  %v36 = vld [vmem:[%s0 + $0x10] sm:$0xff]
  %v37 = vld [vmem:[%s0 + $0x18] sm:$0xff]
  %v38 = vld [vmem:[%s0 + $0x20] sm:$0xff]
  %v39 = vld [vmem:[%s0 + $0x28] sm:$0xff]
  %v40 = vld [vmem:[%s0 + $0x30] sm:$0xff]
  %v41 = vld [vmem:[%s0 + $0x38] sm:$0xff]
  %v42 = vld [vmem:[%s1] sm:$0xf]
  %v43 = vld [vmem:[%s3] sm:$0x1]
  %v45 = vperm.slane %v43, 0
  %vm47 = vcmask 31744
  %v49 = vsel %vm47, %v34, 0
  %v52 = vsel %vm47, %v35, 0
  %v55 = vsel %vm47, %v36, 0
  %v58 = vsel %vm47, %v37, 0
  %v61 = vsel %vm47, %v38, 0
  %v64 = vsel %vm47, %v39, 0
  %v67 = vsel %vm47, %v40, 0
  %v70 = vsel %vm47, %v41, 0
  %vm72 = vcmask 1043456
  %v74 = vsel %vm72, %v42, 0
  %76 = vmatpush.msra.mxu0 0.0
  %77 = vmatpush.msra.mxu0 0.0
  %78 = vmatpush.msra.mxu0 0.0
  %79 = vmatpush.msra.mxu0 0.0
  %80 = vmatpush.msra.mxu0 0.0
  %81 = vmatpush.msra.mxu0 0.0
  %82 = vmatpush.msra.mxu0 0.0
  %83 = vmatpush.msra.mxu0 0.0
  %84 = vmatpush.msra.mxu0 0.0
  %85 = vmatpush.msra.mxu0 0.0
  %86 = vmatpush.msra.mxu0 0.0
  %87 = vmatpush.msra.mxu0 0.0
  %88 = vmatpush.msra.mxu0 0.0
  %89 = vmatpush.msra.mxu0 0.0
  %90 = vmatpush.msra.mxu0 0.0
  %91 = vmatpush.msra.mxu0 %v74
  %92 = vmatmul.f32.gmra.mxu0 %v49
  %v93 = vpop.f32.mrf.mxu0
  %v94 = vadd.f32 %v45, %v93
  %95 = vmatmul.f32.gmra.mxu0 %v52
  %v96 = vpop.f32.mrf.mxu0
  %v97 = vadd.f32 %v45, %v96
  %98 = vmatmul.f32.gmra.mxu0 %v55
  %v99 = vpop.f32.mrf.mxu0
  %v100 = vadd.f32 %v45, %v99
  %101 = vmatmul.f32.gmra.mxu0 %v58
  %v102 = vpop.f32.mrf.mxu0
  %v103 = vadd.f32 %v45, %v102
  %104 = vmatmul.f32.gmra.mxu0 %v61
  %v105 = vpop.f32.mrf.mxu0
  %v106 = vadd.f32 %v45, %v105
  %107 = vmatmul.f32.gmra.mxu0 %v64
  %v108 = vpop.f32.mrf.mxu0
  %v109 = vadd.f32 %v45, %v108
  %110 = vmatmul.f32.gmra.mxu0 %v67
  %v111 = vpop.f32.mrf.mxu0
  %v112 = vadd.f32 %v45, %v111
  %113 = vmatmul.f32.gmra.mxu0 %v70
  %v114 = vpop.f32.mrf.mxu0
  %v115 = vadd.f32 %v45, %v114
  %116 = vdwg.mxu0
  %117 = vst [vmem:[#allocation3] sm:$0xff] %v94
  %118 = vst [vmem:[#allocation3 + $0x8] sm:$0xff] %v97
  %119 = vst [vmem:[#allocation3 + $0x10] sm:$0xff] %v100
  %120 = vst [vmem:[#allocation3 + $0x18] sm:$0xff] %v103
  %121 = vst [vmem:[#allocation3 + $0x20] sm:$0xff] %v106
  %122 = vst [vmem:[#allocation3 + $0x28] sm:$0xff] %v109
  %123 = vst [vmem:[#allocation3 + $0x30] sm:$0xff] %v112
  %124 = vst [vmem:[#allocation3 + $0x38] sm:$0xff] %v115
  %vm125 = vcmask 261120
  %126 = vst.msk [vmem:[#allocation4] sm:$0xff] %vm125, 0.0
  %127 = vst.msk [vmem:[#allocation5] sm:$0xff] %vm125, 0.0
  %v128 = vld [vmem:[#allocation3] sm:$0xff]
  %v129 = vld [vmem:[#allocation4] sm:$0xff]
  %v130 = vld [vmem:[%s2] sm:$0xff]
  %v131 = vld [vmem:[%s2 + $0x8] sm:$0xff]
  %v132 = vld [vmem:[%s2 + $0x10] sm:$0xff]
  %v133 = vld [vmem:[%s2 + $0x18] sm:$0xff]
  %v135 = vsel %vm125, %v129, 0
  %137 = vmatpush.msra.mxu0 0.0
  %138 = vmatpush.msra.mxu0 0.0
  %139 = vmatpush.msra.mxu0 0.0
  %140 = vmatpush.msra.mxu0 0.0
  %141 = vmatpush.msra.mxu0 0.0
  %142 = vmatpush.msra.mxu0 0.0
  %143 = vmatpush.msra.mxu0 0.0
  %144 = vmatpush.msra.mxu0 0.0
  %145 = vmatpush.msra.mxu0 0.0
  %146 = vmatpush.msra.mxu0 0.0
  %147 = vmatpush.msra.mxu0 0.0
  %148 = vmatpush.msra.mxu0 0.0
  %149 = vmatpush.msra.mxu0 %v133
  %150 = vmatpush.msra.mxu0 %v132
  %151 = vmatpush.msra.mxu0 %v131
  %152 = vmatpush.msra.mxu0 %v130
  %153 = vmatmul.f32.gmra.mxu0 %v135
  %v154 = vpop.f32.mrf.mxu0
  %v155 = vadd.f32 0.0, %v154
  %156 = vdwg.mxu0
  %v157 = vadd.f32 %v128, %v155
  %v158 = vxor.u32 %v157, 2147483648
  %v159 = vmul.f32 %v158, 1.442695
  %v160 = vpow.pop %v159
  %v161 = vadd.f32 %v160, 1.0
  %v162 = vrcp.pop %v161
  %v163 = vmul.f32 %v161, %v162
  %v164 = vsub.f32 1.0, %v163
  %v165 = vmul.f32 %v162, %v164
  %v166 = vadd.f32 %v162, %v165
  %vm167 = vweird.f32 %v161
  %vm168 = vweird.f32 %v162
  %vm169 = vmor %vm167, %vm168
  %v170 = vsel %vm169, %v162, %v166
  %v171 = vand.u32 2147483647, %v161
  %vm172 = vcmp.eq.f32.partialorder %v171, 8.507059e+37
  %v173 = vand.u32 %v161, 2147483648
  %v174 = vor.u32 1.1754944e-38, %v173
  %v175 = vsel %vm172, %v174, %v170
  %v176 = vmul.f32 1.0, %v175
  %v177 = vtanh.pop %v157
  %v178 = vld [vmem:[#allocation5] sm:$0xff]
  %180 = vrot.lane.b32.xlu0 %v178, 32
  %v181 = vpop.permute.xlu0 %180
  %v183 = vmul.f32 %v176, %v181
  %185 = vrot.lane.b32.xlu0 %v177, 64
  %v186 = vpop.permute.xlu0 %185
  %v188 = vmul.f32 %v176, %v186
  %190 = vrot.lane.b32.xlu0 %v188, 32
  %v191 = vpop.permute.xlu0 %190
  %v193 = vadd.f32 %v183, %v191
  %v194 = vtanh.pop %v193
  %196 = vrot.lane.b32.xlu0 %v194, 64
  %v197 = vpop.permute.xlu0 %196
  %v199 = vmul.f32 %v176, %v197
  %201 = vrot.lane.b32.xlu0 %v193, 96
  %v202 = vpop.permute.xlu0 %201
  %204 = vst.msk [vmem:[#allocation5] sm:$0xff] %vm125, %v202
  %206 = vrot.lane.b32.xlu0 %v199, 32
  %v207 = vpop.permute.xlu0 %206
  %209 = vst.msk [vmem:[#allocation4] sm:$0xff] %vm125, %v207
  %210 = vst.msk [vmem:[#allocation2] sm:$0xff] %vm125, %v207
  %s211 = scalar_lea.vmem [#allocation3], 8
  %v212 = vld [vmem:[%s211] sm:$0xff]
  %v213 = vld [vmem:[#allocation4] sm:$0xff]
  %v214 = vld [vmem:[%s2] sm:$0xff]
  %v215 = vld [vmem:[%s2 + $0x8] sm:$0xff]
  %v216 = vld [vmem:[%s2 + $0x10] sm:$0xff]
  %v217 = vld [vmem:[%s2 + $0x18] sm:$0xff]
  %v219 = vsel %vm125, %v213, 0
  %221 = vmatpush.msra.mxu0 0.0
  %222 = vmatpush.msra.mxu0 0.0
  %223 = vmatpush.msra.mxu0 0.0
  %224 = vmatpush.msra.mxu0 0.0
  %225 = vmatpush.msra.mxu0 0.0
  %226 = vmatpush.msra.mxu0 0.0
  %227 = vmatpush.msra.mxu0 0.0
  %228 = vmatpush.msra.mxu0 0.0
  %229 = vmatpush.msra.mxu0 0.0
  %230 = vmatpush.msra.mxu0 0.0
  %231 = vmatpush.msra.mxu0 0.0
  %232 = vmatpush.msra.mxu0 0.0
  %233 = vmatpush.msra.mxu0 %v217
  %234 = vmatpush.msra.mxu0 %v216
  %235 = vmatpush.msra.mxu0 %v215
  %236 = vmatpush.msra.mxu0 %v214
  %237 = vmatmul.f32.gmra.mxu0 %v219
  %v238 = vpop.f32.mrf.mxu0
  %v239 = vadd.f32 0.0, %v238
  %240 = vdwg.mxu0
  %v241 = vadd.f32 %v212, %v239
  %v242 = vxor.u32 %v241, 2147483648
  %v243 = vmul.f32 %v242, 1.442695
  %v244 = vpow.pop %v243
  %v245 = vadd.f32 %v244, 1.0
  %v246 = vrcp.pop %v245
  %v247 = vmul.f32 %v245, %v246
  %v248 = vsub.f32 1.0, %v247
  %v249 = vmul.f32 %v246, %v248
  %v250 = vadd.f32 %v246, %v249
  %vm251 = vweird.f32 %v245
  %vm252 = vweird.f32 %v246
  %vm253 = vmor %vm251, %vm252
  %v254 = vsel %vm253, %v246, %v250
  %v255 = vand.u32 2147483647, %v245
  %vm256 = vcmp.eq.f32.partialorder %v255, 8.507059e+37
  %v257 = vand.u32 %v245, 2147483648
  %v258 = vor.u32 1.1754944e-38, %v257
  %v259 = vsel %vm256, %v258, %v254
  %v260 = vmul.f32 1.0, %v259
  %v261 = vtanh.pop %v241
  %v262 = vld [vmem:[#allocation5] sm:$0xff]
  %264 = vrot.lane.b32.xlu0 %v262, 32
  %v265 = vpop.permute.xlu0 %264
  %v267 = vmul.f32 %v260, %v265
  %269 = vrot.lane.b32.xlu0 %v261, 64
  %v270 = vpop.permute.xlu0 %269
  %v272 = vmul.f32 %v260, %v270
  %274 = vrot.lane.b32.xlu0 %v272, 32
  %v275 = vpop.permute.xlu0 %274
  %v277 = vadd.f32 %v267, %v275
  %v278 = vtanh.pop %v277
  %280 = vrot.lane.b32.xlu0 %v278, 64
  %v281 = vpop.permute.xlu0 %280
  %v283 = vmul.f32 %v260, %v281
  %285 = vrot.lane.b32.xlu0 %v277, 96
  %v286 = vpop.permute.xlu0 %285
  %288 = vst.msk [vmem:[#allocation5] sm:$0xff] %vm125, %v286
  %290 = vrot.lane.b32.xlu0 %v283, 32
  %v291 = vpop.permute.xlu0 %290
  %293 = vst.msk [vmem:[#allocation4] sm:$0xff] %vm125, %v291
  %s294 = scalar_lea.vmem [#allocation2], 8
  %295 = vst.msk [vmem:[%s294] sm:$0xff] %vm125, %v291
  %s296 = scalar_lea.vmem [#allocation3], 16
  %v297 = vld [vmem:[%s296] sm:$0xff]
  %v298 = vld [vmem:[#allocation4] sm:$0xff]
  %v299 = vld [vmem:[%s2] sm:$0xff]
  %v300 = vld [vmem:[%s2 + $0x8] sm:$0xff]
  %v301 = vld [vmem:[%s2 + $0x10] sm:$0xff]
  %v302 = vld [vmem:[%s2 + $0x18] sm:$0xff]
  %v304 = vsel %vm125, %v298, 0
  %306 = vmatpush.msra.mxu0 0.0
  %307 = vmatpush.msra.mxu0 0.0
  %308 = vmatpush.msra.mxu0 0.0
  %309 = vmatpush.msra.mxu0 0.0
  %310 = vmatpush.msra.mxu0 0.0
  %311 = vmatpush.msra.mxu0 0.0
  %312 = vmatpush.msra.mxu0 0.0
  %313 = vmatpush.msra.mxu0 0.0
  %314 = vmatpush.msra.mxu0 0.0
  %315 = vmatpush.msra.mxu0 0.0
  %316 = vmatpush.msra.mxu0 0.0
  %317 = vmatpush.msra.mxu0 0.0
  %318 = vmatpush.msra.mxu0 %v302
  %319 = vmatpush.msra.mxu0 %v301
  %320 = vmatpush.msra.mxu0 %v300
  %321 = vmatpush.msra.mxu0 %v299
  %322 = vmatmul.f32.gmra.mxu0 %v304
  %v323 = vpop.f32.mrf.mxu0
  %v324 = vadd.f32 0.0, %v323
  %325 = vdwg.mxu0
  %v326 = vadd.f32 %v297, %v324
  %v327 = vxor.u32 %v326, 2147483648
  %v328 = vmul.f32 %v327, 1.442695
  %v329 = vpow.pop %v328
  %v330 = vadd.f32 %v329, 1.0
  %v331 = vrcp.pop %v330
  %v332 = vmul.f32 %v330, %v331
  %v333 = vsub.f32 1.0, %v332
  %v334 = vmul.f32 %v331, %v333
  %v335 = vadd.f32 %v331, %v334
  %vm336 = vweird.f32 %v330
  %vm337 = vweird.f32 %v331
  %vm338 = vmor %vm336, %vm337
  %v339 = vsel %vm338, %v331, %v335
  %v340 = vand.u32 2147483647, %v330
  %vm341 = vcmp.eq.f32.partialorder %v340, 8.507059e+37
  %v342 = vand.u32 %v330, 2147483648
  %v343 = vor.u32 1.1754944e-38, %v342
  %v344 = vsel %vm341, %v343, %v339
  %v345 = vmul.f32 1.0, %v344
  %v346 = vtanh.pop %v326
  %v347 = vld [vmem:[#allocation5] sm:$0xff]
  %349 = vrot.lane.b32.xlu0 %v347, 32
  %v350 = vpop.permute.xlu0 %349
  %v352 = vmul.f32 %v345, %v350
  %354 = vrot.lane.b32.xlu0 %v346, 64
  %v355 = vpop.permute.xlu0 %354
  %v357 = vmul.f32 %v345, %v355
  %359 = vrot.lane.b32.xlu0 %v357, 32
  %v360 = vpop.permute.xlu0 %359
  %v362 = vadd.f32 %v352, %v360
  %v363 = vtanh.pop %v362
  %365 = vrot.lane.b32.xlu0 %v363, 64
  %v366 = vpop.permute.xlu0 %365
  %v368 = vmul.f32 %v345, %v366
  %370 = vrot.lane.b32.xlu0 %v362, 96
  %v371 = vpop.permute.xlu0 %370
  %373 = vst.msk [vmem:[#allocation5] sm:$0xff] %vm125, %v371
  %375 = vrot.lane.b32.xlu0 %v368, 32
  %v376 = vpop.permute.xlu0 %375
  %378 = vst.msk [vmem:[#allocation4] sm:$0xff] %vm125, %v376
  %s379 = scalar_lea.vmem [#allocation2], 16
  %380 = vst.msk [vmem:[%s379] sm:$0xff] %vm125, %v376
  %s381 = scalar_lea.vmem [#allocation3], 24
  %v382 = vld [vmem:[%s381] sm:$0xff]
  %v383 = vld [vmem:[#allocation4] sm:$0xff]
  %v384 = vld [vmem:[%s2] sm:$0xff]
  %v385 = vld [vmem:[%s2 + $0x8] sm:$0xff]
  %v386 = vld [vmem:[%s2 + $0x10] sm:$0xff]
  %v387 = vld [vmem:[%s2 + $0x18] sm:$0xff]
  %v389 = vsel %vm125, %v383, 0
  %391 = vmatpush.msra.mxu0 0.0
  %392 = vmatpush.msra.mxu0 0.0
  %393 = vmatpush.msra.mxu0 0.0
  %394 = vmatpush.msra.mxu0 0.0
  %395 = vmatpush.msra.mxu0 0.0
  %396 = vmatpush.msra.mxu0 0.0
  %397 = vmatpush.msra.mxu0 0.0
  %398 = vmatpush.msra.mxu0 0.0
  %399 = vmatpush.msra.mxu0 0.0
  %400 = vmatpush.msra.mxu0 0.0
  %401 = vmatpush.msra.mxu0 0.0
  %402 = vmatpush.msra.mxu0 0.0
  %403 = vmatpush.msra.mxu0 %v387
  %404 = vmatpush.msra.mxu0 %v386
  %405 = vmatpush.msra.mxu0 %v385
  %406 = vmatpush.msra.mxu0 %v384
  %407 = vmatmul.f32.gmra.mxu0 %v389
  %v408 = vpop.f32.mrf.mxu0
  %v409 = vadd.f32 0.0, %v408
  %410 = vdwg.mxu0
  %v411 = vadd.f32 %v382, %v409
  %v412 = vxor.u32 %v411, 2147483648
  %v413 = vmul.f32 %v412, 1.442695
  %v414 = vpow.pop %v413
  %v415 = vadd.f32 %v414, 1.0
  %v416 = vrcp.pop %v415
  %v417 = vmul.f32 %v415, %v416
  %v418 = vsub.f32 1.0, %v417
  %v419 = vmul.f32 %v416, %v418
  %v420 = vadd.f32 %v416, %v419
  %vm421 = vweird.f32 %v415
  %vm422 = vweird.f32 %v416
  %vm423 = vmor %vm421, %vm422
  %v424 = vsel %vm423, %v416, %v420
  %v425 = vand.u32 2147483647, %v415
  %vm426 = vcmp.eq.f32.partialorder %v425, 8.507059e+37
  %v427 = vand.u32 %v415, 2147483648
  %v428 = vor.u32 1.1754944e-38, %v427
  %v429 = vsel %vm426, %v428, %v424
  %v430 = vmul.f32 1.0, %v429
  %v431 = vtanh.pop %v411
  %v432 = vld [vmem:[#allocation5] sm:$0xff]
  %434 = vrot.lane.b32.xlu0 %v432, 32
  %v435 = vpop.permute.xlu0 %434
  %v437 = vmul.f32 %v430, %v435
  %439 = vrot.lane.b32.xlu0 %v431, 64
  %v440 = vpop.permute.xlu0 %439
  %v442 = vmul.f32 %v430, %v440
  %444 = vrot.lane.b32.xlu0 %v442, 32
  %v445 = vpop.permute.xlu0 %444
  %v447 = vadd.f32 %v437, %v445
  %v448 = vtanh.pop %v447
  %450 = vrot.lane.b32.xlu0 %v448, 64
  %v451 = vpop.permute.xlu0 %450
  %v453 = vmul.f32 %v430, %v451
  %455 = vrot.lane.b32.xlu0 %v447, 96
  %v456 = vpop.permute.xlu0 %455
  %458 = vst.msk [vmem:[#allocation5] sm:$0xff] %vm125, %v456
  %460 = vrot.lane.b32.xlu0 %v453, 32
  %v461 = vpop.permute.xlu0 %460
  %463 = vst.msk [vmem:[#allocation4] sm:$0xff] %vm125, %v461
  %s464 = scalar_lea.vmem [#allocation2], 24
  %465 = vst.msk [vmem:[%s464] sm:$0xff] %vm125, %v461
  %s466 = scalar_lea.vmem [#allocation3], 32
  %v467 = vld [vmem:[%s466] sm:$0xff]
  %v468 = vld [vmem:[#allocation4] sm:$0xff]
  %v469 = vld [vmem:[%s2] sm:$0xff]
  %v470 = vld [vmem:[%s2 + $0x8] sm:$0xff]
  %v471 = vld [vmem:[%s2 + $0x10] sm:$0xff]
  %v472 = vld [vmem:[%s2 + $0x18] sm:$0xff]
  %v474 = vsel %vm125, %v468, 0
  %476 = vmatpush.msra.mxu0 0.0
  %477 = vmatpush.msra.mxu0 0.0
  %478 = vmatpush.msra.mxu0 0.0
  %479 = vmatpush.msra.mxu0 0.0
  %480 = vmatpush.msra.mxu0 0.0
  %481 = vmatpush.msra.mxu0 0.0
  %482 = vmatpush.msra.mxu0 0.0
  %483 = vmatpush.msra.mxu0 0.0
  %484 = vmatpush.msra.mxu0 0.0
  %485 = vmatpush.msra.mxu0 0.0
  %486 = vmatpush.msra.mxu0 0.0
  %487 = vmatpush.msra.mxu0 0.0
  %488 = vmatpush.msra.mxu0 %v472
  %489 = vmatpush.msra.mxu0 %v471
  %490 = vmatpush.msra.mxu0 %v470
  %491 = vmatpush.msra.mxu0 %v469
  %492 = vmatmul.f32.gmra.mxu0 %v474
  %v493 = vpop.f32.mrf.mxu0
  %v494 = vadd.f32 0.0, %v493
  %495 = vdwg.mxu0
  %v496 = vadd.f32 %v467, %v494
  %v497 = vxor.u32 %v496, 2147483648
  %v498 = vmul.f32 %v497, 1.442695
  %v499 = vpow.pop %v498
  %v500 = vadd.f32 %v499, 1.0
  %v501 = vrcp.pop %v500
  %v502 = vmul.f32 %v500, %v501
  %v503 = vsub.f32 1.0, %v502
  %v504 = vmul.f32 %v501, %v503
  %v505 = vadd.f32 %v501, %v504
  %vm506 = vweird.f32 %v500
  %vm507 = vweird.f32 %v501
  %vm508 = vmor %vm506, %vm507
  %v509 = vsel %vm508, %v501, %v505
  %v510 = vand.u32 2147483647, %v500
  %vm511 = vcmp.eq.f32.partialorder %v510, 8.507059e+37
  %v512 = vand.u32 %v500, 2147483648
  %v513 = vor.u32 1.1754944e-38, %v512
  %v514 = vsel %vm511, %v513, %v509
  %v515 = vmul.f32 1.0, %v514
  %v516 = vtanh.pop %v496
  %v517 = vld [vmem:[#allocation5] sm:$0xff]
  %519 = vrot.lane.b32.xlu0 %v517, 32
  %v520 = vpop.permute.xlu0 %519
  %v522 = vmul.f32 %v515, %v520
  %524 = vrot.lane.b32.xlu0 %v516, 64
  %v525 = vpop.permute.xlu0 %524
  %v527 = vmul.f32 %v515, %v525
  %529 = vrot.lane.b32.xlu0 %v527, 32
  %v530 = vpop.permute.xlu0 %529
  %v532 = vadd.f32 %v522, %v530
  %v533 = vtanh.pop %v532
  %535 = vrot.lane.b32.xlu0 %v533, 64
  %v536 = vpop.permute.xlu0 %535
  %v538 = vmul.f32 %v515, %v536
  %540 = vrot.lane.b32.xlu0 %v532, 96
  %v541 = vpop.permute.xlu0 %540
  %543 = vst.msk [vmem:[#allocation5] sm:$0xff] %vm125, %v541
  %545 = vrot.lane.b32.xlu0 %v538, 32
  %v546 = vpop.permute.xlu0 %545
  %548 = vst.msk [vmem:[#allocation4] sm:$0xff] %vm125, %v546
  %s549 = scalar_lea.vmem [#allocation2], 32
  %550 = vst.msk [vmem:[%s549] sm:$0xff] %vm125, %v546
  %s551 = scalar_lea.vmem [#allocation3], 40
  %v552 = vld [vmem:[%s551] sm:$0xff]
  %v553 = vld [vmem:[#allocation4] sm:$0xff]
  %v554 = vld [vmem:[%s2] sm:$0xff]
  %v555 = vld [vmem:[%s2 + $0x8] sm:$0xff]
  %v556 = vld [vmem:[%s2 + $0x10] sm:$0xff]
  %v557 = vld [vmem:[%s2 + $0x18] sm:$0xff]
  %v559 = vsel %vm125, %v553, 0
  %561 = vmatpush.msra.mxu0 0.0
  %562 = vmatpush.msra.mxu0 0.0
  %563 = vmatpush.msra.mxu0 0.0
  %564 = vmatpush.msra.mxu0 0.0
  %565 = vmatpush.msra.mxu0 0.0
  %566 = vmatpush.msra.mxu0 0.0
  %567 = vmatpush.msra.mxu0 0.0
  %568 = vmatpush.msra.mxu0 0.0
  %569 = vmatpush.msra.mxu0 0.0
  %570 = vmatpush.msra.mxu0 0.0
  %571 = vmatpush.msra.mxu0 0.0
  %572 = vmatpush.msra.mxu0 0.0
  %573 = vmatpush.msra.mxu0 %v557
  %574 = vmatpush.msra.mxu0 %v556
  %575 = vmatpush.msra.mxu0 %v555
  %576 = vmatpush.msra.mxu0 %v554
  %577 = vmatmul.f32.gmra.mxu0 %v559
  %v578 = vpop.f32.mrf.mxu0
  %v579 = vadd.f32 0.0, %v578
  %580 = vdwg.mxu0
  %v581 = vadd.f32 %v552, %v579
  %v582 = vxor.u32 %v581, 2147483648
  %v583 = vmul.f32 %v582, 1.442695
  %v584 = vpow.pop %v583
  %v585 = vadd.f32 %v584, 1.0
  %v586 = vrcp.pop %v585
  %v587 = vmul.f32 %v585, %v586
  %v588 = vsub.f32 1.0, %v587
  %v589 = vmul.f32 %v586, %v588
  %v590 = vadd.f32 %v586, %v589
  %vm591 = vweird.f32 %v585
  %vm592 = vweird.f32 %v586
  %vm593 = vmor %vm591, %vm592
  %v594 = vsel %vm593, %v586, %v590
  %v595 = vand.u32 2147483647, %v585
  %vm596 = vcmp.eq.f32.partialorder %v595, 8.507059e+37
  %v597 = vand.u32 %v585, 2147483648
  %v598 = vor.u32 1.1754944e-38, %v597
  %v599 = vsel %vm596, %v598, %v594
  %v600 = vmul.f32 1.0, %v599
  %v601 = vtanh.pop %v581
  %v602 = vld [vmem:[#allocation5] sm:$0xff]
  %604 = vrot.lane.b32.xlu0 %v602, 32
  %v605 = vpop.permute.xlu0 %604
  %v607 = vmul.f32 %v600, %v605
  %609 = vrot.lane.b32.xlu0 %v601, 64
  %v610 = vpop.permute.xlu0 %609
  %v612 = vmul.f32 %v600, %v610
  %614 = vrot.lane.b32.xlu0 %v612, 32
  %v615 = vpop.permute.xlu0 %614
  %v617 = vadd.f32 %v607, %v615
  %v618 = vtanh.pop %v617
  %620 = vrot.lane.b32.xlu0 %v618, 64
  %v621 = vpop.permute.xlu0 %620
  %v623 = vmul.f32 %v600, %v621
  %625 = vrot.lane.b32.xlu0 %v617, 96
  %v626 = vpop.permute.xlu0 %625
  %628 = vst.msk [vmem:[#allocation5] sm:$0xff] %vm125, %v626
  %630 = vrot.lane.b32.xlu0 %v623, 32
  %v631 = vpop.permute.xlu0 %630
  %633 = vst.msk [vmem:[#allocation4] sm:$0xff] %vm125, %v631
  %s634 = scalar_lea.vmem [#allocation2], 40
  %635 = vst.msk [vmem:[%s634] sm:$0xff] %vm125, %v631
  %s636 = scalar_lea.vmem [#allocation3], 48
  %v637 = vld [vmem:[%s636] sm:$0xff]
  %v638 = vld [vmem:[#allocation4] sm:$0xff]
  %v639 = vld [vmem:[%s2] sm:$0xff]
  %v640 = vld [vmem:[%s2 + $0x8] sm:$0xff]
  %v641 = vld [vmem:[%s2 + $0x10] sm:$0xff]
  %v642 = vld [vmem:[%s2 + $0x18] sm:$0xff]
  %v644 = vsel %vm125, %v638, 0
  %646 = vmatpush.msra.mxu0 0.0
  %647 = vmatpush.msra.mxu0 0.0
  %648 = vmatpush.msra.mxu0 0.0
  %649 = vmatpush.msra.mxu0 0.0
  %650 = vmatpush.msra.mxu0 0.0
  %651 = vmatpush.msra.mxu0 0.0
  %652 = vmatpush.msra.mxu0 0.0
  %653 = vmatpush.msra.mxu0 0.0
  %654 = vmatpush.msra.mxu0 0.0
  %655 = vmatpush.msra.mxu0 0.0
  %656 = vmatpush.msra.mxu0 0.0
  %657 = vmatpush.msra.mxu0 0.0
  %658 = vmatpush.msra.mxu0 %v642
  %659 = vmatpush.msra.mxu0 %v641
  %660 = vmatpush.msra.mxu0 %v640
  %661 = vmatpush.msra.mxu0 %v639
  %662 = vmatmul.f32.gmra.mxu0 %v644
  %v663 = vpop.f32.mrf.mxu0
  %v664 = vadd.f32 0.0, %v663
  %665 = vdwg.mxu0
  %v666 = vadd.f32 %v637, %v664
  %v667 = vxor.u32 %v666, 2147483648
  %v668 = vmul.f32 %v667, 1.442695
  %v669 = vpow.pop %v668
  %v670 = vadd.f32 %v669, 1.0
  %v671 = vrcp.pop %v670
  %v672 = vmul.f32 %v670, %v671
  %v673 = vsub.f32 1.0, %v672
  %v674 = vmul.f32 %v671, %v673
  %v675 = vadd.f32 %v671, %v674
  %vm676 = vweird.f32 %v670
  %vm677 = vweird.f32 %v671
  %vm678 = vmor %vm676, %vm677
  %v679 = vsel %vm678, %v671, %v675
  %v680 = vand.u32 2147483647, %v670
  %vm681 = vcmp.eq.f32.partialorder %v680, 8.507059e+37
  %v682 = vand.u32 %v670, 2147483648
  %v683 = vor.u32 1.1754944e-38, %v682
  %v684 = vsel %vm681, %v683, %v679
  %v685 = vmul.f32 1.0, %v684
  %v686 = vtanh.pop %v666
  %v687 = vld [vmem:[#allocation5] sm:$0xff]
  %689 = vrot.lane.b32.xlu0 %v687, 32
  %v690 = vpop.permute.xlu0 %689
  %v692 = vmul.f32 %v685, %v690
  %694 = vrot.lane.b32.xlu0 %v686, 64
  %v695 = vpop.permute.xlu0 %694
  %v697 = vmul.f32 %v685, %v695
  %699 = vrot.lane.b32.xlu0 %v697, 32
  %v700 = vpop.permute.xlu0 %699
  %v702 = vadd.f32 %v692, %v700
  %v703 = vtanh.pop %v702
  %705 = vrot.lane.b32.xlu0 %v703, 64
  %v706 = vpop.permute.xlu0 %705
  %v708 = vmul.f32 %v685, %v706
  %710 = vrot.lane.b32.xlu0 %v702, 96
  %v711 = vpop.permute.xlu0 %710
  %713 = vst.msk [vmem:[#allocation5] sm:$0xff] %vm125, %v711
  %715 = vrot.lane.b32.xlu0 %v708, 32
  %v716 = vpop.permute.xlu0 %715
  %718 = vst.msk [vmem:[#allocation4] sm:$0xff] %vm125, %v716
  %s719 = scalar_lea.vmem [#allocation2], 48
  %720 = vst.msk [vmem:[%s719] sm:$0xff] %vm125, %v716
  %s721 = scalar_lea.vmem [#allocation3], 56
  %v722 = vld [vmem:[%s721] sm:$0xff]
  %v723 = vld [vmem:[#allocation4] sm:$0xff]
  %v724 = vld [vmem:[%s2] sm:$0xff]
  %v725 = vld [vmem:[%s2 + $0x8] sm:$0xff]
  %v726 = vld [vmem:[%s2 + $0x10] sm:$0xff]
  %v727 = vld [vmem:[%s2 + $0x18] sm:$0xff]
  %v729 = vsel %vm125, %v723, 0
  %731 = vmatpush.msra.mxu0 0.0
  %732 = vmatpush.msra.mxu0 0.0
  %733 = vmatpush.msra.mxu0 0.0
  %734 = vmatpush.msra.mxu0 0.0
  %735 = vmatpush.msra.mxu0 0.0
  %736 = vmatpush.msra.mxu0 0.0
  %737 = vmatpush.msra.mxu0 0.0
  %738 = vmatpush.msra.mxu0 0.0
  %739 = vmatpush.msra.mxu0 0.0
  %740 = vmatpush.msra.mxu0 0.0
  %741 = vmatpush.msra.mxu0 0.0
  %742 = vmatpush.msra.mxu0 0.0
  %743 = vmatpush.msra.mxu0 %v727
  %744 = vmatpush.msra.mxu0 %v726
  %745 = vmatpush.msra.mxu0 %v725
  %746 = vmatpush.msra.mxu0 %v724
  %747 = vmatmul.f32.gmra.mxu0 %v729
  %v748 = vpop.f32.mrf.mxu0
  %v749 = vadd.f32 0.0, %v748
  %750 = vdwg.mxu0
  %v751 = vadd.f32 %v722, %v749
  %v752 = vxor.u32 %v751, 2147483648
  %v753 = vmul.f32 %v752, 1.442695
  %v754 = vpow.pop %v753
  %v755 = vadd.f32 %v754, 1.0
  %v756 = vrcp.pop %v755
  %v757 = vmul.f32 %v755, %v756
  %v758 = vsub.f32 1.0, %v757
  %v759 = vmul.f32 %v756, %v758
  %v760 = vadd.f32 %v756, %v759
  %vm761 = vweird.f32 %v755
  %vm762 = vweird.f32 %v756
  %vm763 = vmor %vm761, %vm762
  %v764 = vsel %vm763, %v756, %v760
  %v765 = vand.u32 2147483647, %v755
  %vm766 = vcmp.eq.f32.partialorder %v765, 8.507059e+37
  %v767 = vand.u32 %v755, 2147483648
  %v768 = vor.u32 1.1754944e-38, %v767
  %v769 = vsel %vm766, %v768, %v764
  %v770 = vmul.f32 1.0, %v769
  %v771 = vtanh.pop %v751
  %v772 = vld [vmem:[#allocation5] sm:$0xff]
  %774 = vrot.lane.b32.xlu0 %v772, 32
  %v775 = vpop.permute.xlu0 %774
  %v777 = vmul.f32 %v770, %v775
  %779 = vrot.lane.b32.xlu0 %v771, 64
  %v780 = vpop.permute.xlu0 %779
  %v782 = vmul.f32 %v770, %v780
  %784 = vrot.lane.b32.xlu0 %v782, 32
  %v785 = vpop.permute.xlu0 %784
  %v787 = vadd.f32 %v777, %v785
  %v788 = vtanh.pop %v787
  %790 = vrot.lane.b32.xlu0 %v788, 64
  %v791 = vpop.permute.xlu0 %790
  %v793 = vmul.f32 %v770, %v791
  %795 = vrot.lane.b32.xlu0 %v787, 96
  %v796 = vpop.permute.xlu0 %795
  %798 = vst.msk [vmem:[#allocation5] sm:$0xff] %vm125, %v796
  %800 = vrot.lane.b32.xlu0 %v793, 32
  %v801 = vpop.permute.xlu0 %800
  %803 = vst.msk [vmem:[#allocation4] sm:$0xff] %vm125, %v801
  %s804 = scalar_lea.vmem [#allocation2], 56
  %805 = vst.msk [vmem:[%s804] sm:$0xff] %vm125, %v801
  %v806 = vld [vmem:[#allocation2] sm:$0xff]
  %v807 = vld [vmem:[#allocation2 + $0x8] sm:$0xff]
  %v808 = vld [vmem:[#allocation2 + $0x10] sm:$0xff]
  %v809 = vld [vmem:[#allocation2 + $0x18] sm:$0xff]
  %v810 = vld [vmem:[#allocation2 + $0x20] sm:$0xff]
  %v811 = vld [vmem:[#allocation2 + $0x28] sm:$0xff]
  %v812 = vld [vmem:[#allocation2 + $0x30] sm:$0xff]
  %v813 = vld [vmem:[#allocation2 + $0x38] sm:$0xff]
  %v814 = vld [vmem:[%s4] sm:$0xff]
  %v815 = vld [vmem:[%s4 + $0x8] sm:$0xff]
  %v816 = vld [vmem:[%s4 + $0x10] sm:$0xff]
  %v817 = vld [vmem:[%s4 + $0x18] sm:$0xff]
  %v818 = vld [vmem:[%s6] sm:$0x1]
  %v820 = vperm.slane %v818, 0
  %v823 = vsel %vm125, %v806, 0
  %v826 = vsel %vm125, %v807, 0
  %v829 = vsel %vm125, %v808, 0
  %v832 = vsel %vm125, %v809, 0
  %v835 = vsel %vm125, %v810, 0
  %v838 = vsel %vm125, %v811, 0
  %v841 = vsel %vm125, %v812, 0
  %v844 = vsel %vm125, %v813, 0
  %846 = vmatpush.msra.mxu0 0.0
  %847 = vmatpush.msra.mxu0 0.0
  %848 = vmatpush.msra.mxu0 0.0
  %849 = vmatpush.msra.mxu0 0.0
  %850 = vmatpush.msra.mxu0 0.0
  %851 = vmatpush.msra.mxu0 0.0
  %852 = vmatpush.msra.mxu0 0.0
  %853 = vmatpush.msra.mxu0 0.0
  %854 = vmatpush.msra.mxu0 0.0
  %855 = vmatpush.msra.mxu0 0.0
  %856 = vmatpush.msra.mxu0 0.0
  %857 = vmatpush.msra.mxu0 0.0
  %858 = vmatpush.msra.mxu0 %v817
  %859 = vmatpush.msra.mxu0 %v816
  %860 = vmatpush.msra.mxu0 %v815
  %861 = vmatpush.msra.mxu0 %v814
  %862 = vmatmul.f32.gmra.mxu0 %v823
  %v863 = vpop.f32.mrf.mxu0
  %v864 = vadd.f32 %v820, %v863
  %865 = vmatmul.f32.gmra.mxu0 %v826
  %v866 = vpop.f32.mrf.mxu0
  %v867 = vadd.f32 %v820, %v866
  %868 = vmatmul.f32.gmra.mxu0 %v829
  %v869 = vpop.f32.mrf.mxu0
  %v870 = vadd.f32 %v820, %v869
  %871 = vmatmul.f32.gmra.mxu0 %v832
  %v872 = vpop.f32.mrf.mxu0
  %v873 = vadd.f32 %v820, %v872
  %874 = vmatmul.f32.gmra.mxu0 %v835
  %v875 = vpop.f32.mrf.mxu0
  %v876 = vadd.f32 %v820, %v875
  %877 = vmatmul.f32.gmra.mxu0 %v838
  %v878 = vpop.f32.mrf.mxu0
  %v879 = vadd.f32 %v820, %v878
  %880 = vmatmul.f32.gmra.mxu0 %v841
  %v881 = vpop.f32.mrf.mxu0
  %v882 = vadd.f32 %v820, %v881
  %883 = vmatmul.f32.gmra.mxu0 %v844
  %v884 = vpop.f32.mrf.mxu0
  %v885 = vadd.f32 %v820, %v884
  %886 = vdwg.mxu0
  %887 = vst [vmem:[#allocation3] sm:$0xff] %v864
  %888 = vst [vmem:[#allocation3 + $0x8] sm:$0xff] %v867
  %889 = vst [vmem:[#allocation3 + $0x10] sm:$0xff] %v870
  %890 = vst [vmem:[#allocation3 + $0x18] sm:$0xff] %v873
  %891 = vst [vmem:[#allocation3 + $0x20] sm:$0xff] %v876
  %892 = vst [vmem:[#allocation3 + $0x28] sm:$0xff] %v879
  %893 = vst [vmem:[#allocation3 + $0x30] sm:$0xff] %v882
  %894 = vst [vmem:[#allocation3 + $0x38] sm:$0xff] %v885
  %895 = vst.msk [vmem:[#allocation4] sm:$0xff] %vm125, 0.0
  %896 = vst.msk [vmem:[#allocation5] sm:$0xff] %vm125, 0.0
  %v897 = vld [vmem:[#allocation3] sm:$0xff]
  %v898 = vld [vmem:[#allocation4] sm:$0xff]
  %v899 = vld [vmem:[%s5] sm:$0xff]
  %v900 = vld [vmem:[%s5 + $0x8] sm:$0xff]
  %v901 = vld [vmem:[%s5 + $0x10] sm:$0xff]
  %v902 = vld [vmem:[%s5 + $0x18] sm:$0xff]
  %v904 = vsel %vm125, %v898, 0
  %906 = vmatpush.msra.mxu0 0.0
  %907 = vmatpush.msra.mxu0 0.0
  %908 = vmatpush.msra.mxu0 0.0
  %909 = vmatpush.msra.mxu0 0.0
  %910 = vmatpush.msra.mxu0 0.0
  %911 = vmatpush.msra.mxu0 0.0
  %912 = vmatpush.msra.mxu0 0.0
  %913 = vmatpush.msra.mxu0 0.0
  %914 = vmatpush.msra.mxu0 0.0
  %915 = vmatpush.msra.mxu0 0.0
  %916 = vmatpush.msra.mxu0 0.0
  %917 = vmatpush.msra.mxu0 0.0
  %918 = vmatpush.msra.mxu0 %v902
  %919 = vmatpush.msra.mxu0 %v901
  %920 = vmatpush.msra.mxu0 %v900
  %921 = vmatpush.msra.mxu0 %v899
  %922 = vmatmul.f32.gmra.mxu0 %v904
  %v923 = vpop.f32.mrf.mxu0
  %v924 = vadd.f32 0.0, %v923
  %925 = vdwg.mxu0
  %v926 = vadd.f32 %v897, %v924
  %v927 = vxor.u32 %v926, 2147483648
  %v928 = vmul.f32 %v927, 1.442695
  %v929 = vpow.pop %v928
  %v930 = vadd.f32 %v929, 1.0
  %v931 = vrcp.pop %v930
  %v932 = vmul.f32 %v930, %v931
  %v933 = vsub.f32 1.0, %v932
  %v934 = vmul.f32 %v931, %v933
  %v935 = vadd.f32 %v931, %v934
  %vm936 = vweird.f32 %v930
  %vm937 = vweird.f32 %v931
  %vm938 = vmor %vm936, %vm937
  %v939 = vsel %vm938, %v931, %v935
  %v940 = vand.u32 2147483647, %v930
  %vm941 = vcmp.eq.f32.partialorder %v940, 8.507059e+37
  %v942 = vand.u32 %v930, 2147483648
  %v943 = vor.u32 1.1754944e-38, %v942
  %v944 = vsel %vm941, %v943, %v939
  %v945 = vmul.f32 1.0, %v944
  %v946 = vtanh.pop %v926
  %v947 = vld [vmem:[#allocation5] sm:$0xff]
  %949 = vrot.lane.b32.xlu0 %v947, 32
  %v950 = vpop.permute.xlu0 %949
  %v952 = vmul.f32 %v945, %v950
  %954 = vrot.lane.b32.xlu0 %v946, 64
  %v955 = vpop.permute.xlu0 %954
  %v957 = vmul.f32 %v945, %v955
  %959 = vrot.lane.b32.xlu0 %v957, 32
  %v960 = vpop.permute.xlu0 %959
  %v962 = vadd.f32 %v952, %v960
  %v963 = vtanh.pop %v962
  %965 = vrot.lane.b32.xlu0 %v963, 64
  %v966 = vpop.permute.xlu0 %965
  %v968 = vmul.f32 %v945, %v966
  %970 = vrot.lane.b32.xlu0 %v962, 96
  %v971 = vpop.permute.xlu0 %970
  %973 = vst.msk [vmem:[#allocation5] sm:$0xff] %vm125, %v971
  %975 = vrot.lane.b32.xlu0 %v968, 32
  %v976 = vpop.permute.xlu0 %975
  %978 = vst.msk [vmem:[#allocation4] sm:$0xff] %vm125, %v976
  %v979 = vld [vmem:[%s211] sm:$0xff]
  %v980 = vld [vmem:[#allocation4] sm:$0xff]
  %v981 = vld [vmem:[%s5] sm:$0xff]
  %v982 = vld [vmem:[%s5 + $0x8] sm:$0xff]
  %v983 = vld [vmem:[%s5 + $0x10] sm:$0xff]
  %v984 = vld [vmem:[%s5 + $0x18] sm:$0xff]
  %v986 = vsel %vm125, %v980, 0
  %988 = vmatpush.msra.mxu0 0.0
  %989 = vmatpush.msra.mxu0 0.0
  %990 = vmatpush.msra.mxu0 0.0
  %991 = vmatpush.msra.mxu0 0.0
  %992 = vmatpush.msra.mxu0 0.0
  %993 = vmatpush.msra.mxu0 0.0
  %994 = vmatpush.msra.mxu0 0.0
  %995 = vmatpush.msra.mxu0 0.0
  %996 = vmatpush.msra.mxu0 0.0
  %997 = vmatpush.msra.mxu0 0.0
  %998 = vmatpush.msra.mxu0 0.0
  %999 = vmatpush.msra.mxu0 0.0
  %1000 = vmatpush.msra.mxu0 %v984
  %1001 = vmatpush.msra.mxu0 %v983
  %1002 = vmatpush.msra.mxu0 %v982
  %1003 = vmatpush.msra.mxu0 %v981
  %1004 = vmatmul.f32.gmra.mxu0 %v986
  %v1005 = vpop.f32.mrf.mxu0
  %v1006 = vadd.f32 0.0, %v1005
  %1007 = vdwg.mxu0
  %v1008 = vadd.f32 %v979, %v1006
  %v1009 = vxor.u32 %v1008, 2147483648
  %v1010 = vmul.f32 %v1009, 1.442695
  %v1011 = vpow.pop %v1010
  %v1012 = vadd.f32 %v1011, 1.0
  %v1013 = vrcp.pop %v1012
  %v1014 = vmul.f32 %v1012, %v1013
  %v1015 = vsub.f32 1.0, %v1014
  %v1016 = vmul.f32 %v1013, %v1015
  %v1017 = vadd.f32 %v1013, %v1016
  %vm1018 = vweird.f32 %v1012
  %vm1019 = vweird.f32 %v1013
  %vm1020 = vmor %vm1018, %vm1019
  %v1021 = vsel %vm1020, %v1013, %v1017
  %v1022 = vand.u32 2147483647, %v1012
  %vm1023 = vcmp.eq.f32.partialorder %v1022, 8.507059e+37
  %v1024 = vand.u32 %v1012, 2147483648
  %v1025 = vor.u32 1.1754944e-38, %v1024
  %v1026 = vsel %vm1023, %v1025, %v1021
  %v1027 = vmul.f32 1.0, %v1026
  %v1028 = vtanh.pop %v1008
  %v1029 = vld [vmem:[#allocation5] sm:$0xff]
  %1031 = vrot.lane.b32.xlu0 %v1029, 32
  %v1032 = vpop.permute.xlu0 %1031
  %v1034 = vmul.f32 %v1027, %v1032
  %1036 = vrot.lane.b32.xlu0 %v1028, 64
  %v1037 = vpop.permute.xlu0 %1036
  %v1039 = vmul.f32 %v1027, %v1037
  %1041 = vrot.lane.b32.xlu0 %v1039, 32
  %v1042 = vpop.permute.xlu0 %1041
  %v1044 = vadd.f32 %v1034, %v1042
  %v1045 = vtanh.pop %v1044
  %1047 = vrot.lane.b32.xlu0 %v1045, 64
  %v1048 = vpop.permute.xlu0 %1047
  %v1050 = vmul.f32 %v1027, %v1048
  %1052 = vrot.lane.b32.xlu0 %v1044, 96
  %v1053 = vpop.permute.xlu0 %1052
  %1055 = vst.msk [vmem:[#allocation5] sm:$0xff] %vm125, %v1053
  %1057 = vrot.lane.b32.xlu0 %v1050, 32
  %v1058 = vpop.permute.xlu0 %1057
  %1060 = vst.msk [vmem:[#allocation4] sm:$0xff] %vm125, %v1058
  %v1061 = vld [vmem:[%s296] sm:$0xff]
  %v1062 = vld [vmem:[#allocation4] sm:$0xff]
  %v1063 = vld [vmem:[%s5] sm:$0xff]
  %v1064 = vld [vmem:[%s5 + $0x8] sm:$0xff]
  %v1065 = vld [vmem:[%s5 + $0x10] sm:$0xff]
  %v1066 = vld [vmem:[%s5 + $0x18] sm:$0xff]
  %v1068 = vsel %vm125, %v1062, 0
  %1070 = vmatpush.msra.mxu0 0.0
  %1071 = vmatpush.msra.mxu0 0.0
  %1072 = vmatpush.msra.mxu0 0.0
  %1073 = vmatpush.msra.mxu0 0.0
  %1074 = vmatpush.msra.mxu0 0.0
  %1075 = vmatpush.msra.mxu0 0.0
  %1076 = vmatpush.msra.mxu0 0.0
  %1077 = vmatpush.msra.mxu0 0.0
  %1078 = vmatpush.msra.mxu0 0.0
  %1079 = vmatpush.msra.mxu0 0.0
  %1080 = vmatpush.msra.mxu0 0.0
  %1081 = vmatpush.msra.mxu0 0.0
  %1082 = vmatpush.msra.mxu0 %v1066
  %1083 = vmatpush.msra.mxu0 %v1065
  %1084 = vmatpush.msra.mxu0 %v1064
  %1085 = vmatpush.msra.mxu0 %v1063
  %1086 = vmatmul.f32.gmra.mxu0 %v1068
  %v1087 = vpop.f32.mrf.mxu0
  %v1088 = vadd.f32 0.0, %v1087
  %1089 = vdwg.mxu0
  %v1090 = vadd.f32 %v1061, %v1088
  %v1091 = vxor.u32 %v1090, 2147483648
  %v1092 = vmul.f32 %v1091, 1.442695
  %v1093 = vpow.pop %v1092
  %v1094 = vadd.f32 %v1093, 1.0
  %v1095 = vrcp.pop %v1094
  %v1096 = vmul.f32 %v1094, %v1095
  %v1097 = vsub.f32 1.0, %v1096
  %v1098 = vmul.f32 %v1095, %v1097
  %v1099 = vadd.f32 %v1095, %v1098
  %vm1100 = vweird.f32 %v1094
  %vm1101 = vweird.f32 %v1095
  %vm1102 = vmor %vm1100, %vm1101
  %v1103 = vsel %vm1102, %v1095, %v1099
  %v1104 = vand.u32 2147483647, %v1094
  %vm1105 = vcmp.eq.f32.partialorder %v1104, 8.507059e+37
  %v1106 = vand.u32 %v1094, 2147483648
  %v1107 = vor.u32 1.1754944e-38, %v1106
  %v1108 = vsel %vm1105, %v1107, %v1103
  %v1109 = vmul.f32 1.0, %v1108
  %v1110 = vtanh.pop %v1090
  %v1111 = vld [vmem:[#allocation5] sm:$0xff]
  %1113 = vrot.lane.b32.xlu0 %v1111, 32
  %v1114 = vpop.permute.xlu0 %1113
  %v1116 = vmul.f32 %v1109, %v1114
  %1118 = vrot.lane.b32.xlu0 %v1110, 64
  %v1119 = vpop.permute.xlu0 %1118
  %v1121 = vmul.f32 %v1109, %v1119
  %1123 = vrot.lane.b32.xlu0 %v1121, 32
  %v1124 = vpop.permute.xlu0 %1123
  %v1126 = vadd.f32 %v1116, %v1124
  %v1127 = vtanh.pop %v1126
  %1129 = vrot.lane.b32.xlu0 %v1127, 64
  %v1130 = vpop.permute.xlu0 %1129
  %v1132 = vmul.f32 %v1109, %v1130
  %1134 = vrot.lane.b32.xlu0 %v1126, 96
  %v1135 = vpop.permute.xlu0 %1134
  %1137 = vst.msk [vmem:[#allocation5] sm:$0xff] %vm125, %v1135
  %1139 = vrot.lane.b32.xlu0 %v1132, 32
  %v1140 = vpop.permute.xlu0 %1139
  %1142 = vst.msk [vmem:[#allocation4] sm:$0xff] %vm125, %v1140
  %v1143 = vld [vmem:[%s381] sm:$0xff]
  %v1144 = vld [vmem:[#allocation4] sm:$0xff]
  %v1145 = vld [vmem:[%s5] sm:$0xff]
  %v1146 = vld [vmem:[%s5 + $0x8] sm:$0xff]
  %v1147 = vld [vmem:[%s5 + $0x10] sm:$0xff]
  %v1148 = vld [vmem:[%s5 + $0x18] sm:$0xff]
  %v1150 = vsel %vm125, %v1144, 0
  %1152 = vmatpush.msra.mxu0 0.0
  %1153 = vmatpush.msra.mxu0 0.0
  %1154 = vmatpush.msra.mxu0 0.0
  %1155 = vmatpush.msra.mxu0 0.0
  %1156 = vmatpush.msra.mxu0 0.0
  %1157 = vmatpush.msra.mxu0 0.0
  %1158 = vmatpush.msra.mxu0 0.0
  %1159 = vmatpush.msra.mxu0 0.0
  %1160 = vmatpush.msra.mxu0 0.0
  %1161 = vmatpush.msra.mxu0 0.0
  %1162 = vmatpush.msra.mxu0 0.0
  %1163 = vmatpush.msra.mxu0 0.0
  %1164 = vmatpush.msra.mxu0 %v1148
  %1165 = vmatpush.msra.mxu0 %v1147
  %1166 = vmatpush.msra.mxu0 %v1146
  %1167 = vmatpush.msra.mxu0 %v1145
  %1168 = vmatmul.f32.gmra.mxu0 %v1150
  %v1169 = vpop.f32.mrf.mxu0
  %v1170 = vadd.f32 0.0, %v1169
  %1171 = vdwg.mxu0
  %v1172 = vadd.f32 %v1143, %v1170
  %v1173 = vxor.u32 %v1172, 2147483648
  %v1174 = vmul.f32 %v1173, 1.442695
  %v1175 = vpow.pop %v1174
  %v1176 = vadd.f32 %v1175, 1.0
  %v1177 = vrcp.pop %v1176
  %v1178 = vmul.f32 %v1176, %v1177
  %v1179 = vsub.f32 1.0, %v1178
  %v1180 = vmul.f32 %v1177, %v1179
  %v1181 = vadd.f32 %v1177, %v1180
  %vm1182 = vweird.f32 %v1176
  %vm1183 = vweird.f32 %v1177
  %vm1184 = vmor %vm1182, %vm1183
  %v1185 = vsel %vm1184, %v1177, %v1181
  %v1186 = vand.u32 2147483647, %v1176
  %vm1187 = vcmp.eq.f32.partialorder %v1186, 8.507059e+37
  %v1188 = vand.u32 %v1176, 2147483648
  %v1189 = vor.u32 1.1754944e-38, %v1188
  %v1190 = vsel %vm1187, %v1189, %v1185
  %v1191 = vmul.f32 1.0, %v1190
  %v1192 = vtanh.pop %v1172
  %v1193 = vld [vmem:[#allocation5] sm:$0xff]
  %1195 = vrot.lane.b32.xlu0 %v1193, 32
  %v1196 = vpop.permute.xlu0 %1195
  %v1198 = vmul.f32 %v1191, %v1196
  %1200 = vrot.lane.b32.xlu0 %v1192, 64
  %v1201 = vpop.permute.xlu0 %1200
  %v1203 = vmul.f32 %v1191, %v1201
  %1205 = vrot.lane.b32.xlu0 %v1203, 32
  %v1206 = vpop.permute.xlu0 %1205
  %v1208 = vadd.f32 %v1198, %v1206
  %v1209 = vtanh.pop %v1208
  %1211 = vrot.lane.b32.xlu0 %v1209, 64
  %v1212 = vpop.permute.xlu0 %1211
  %v1214 = vmul.f32 %v1191, %v1212
  %1216 = vrot.lane.b32.xlu0 %v1208, 96
  %v1217 = vpop.permute.xlu0 %1216
  %1219 = vst.msk [vmem:[#allocation5] sm:$0xff] %vm125, %v1217
  %1221 = vrot.lane.b32.xlu0 %v1214, 32
  %v1222 = vpop.permute.xlu0 %1221
  %1224 = vst.msk [vmem:[#allocation4] sm:$0xff] %vm125, %v1222
  %v1225 = vld [vmem:[%s466] sm:$0xff]
  %v1226 = vld [vmem:[#allocation4] sm:$0xff]
  %v1227 = vld [vmem:[%s5] sm:$0xff]
  %v1228 = vld [vmem:[%s5 + $0x8] sm:$0xff]
  %v1229 = vld [vmem:[%s5 + $0x10] sm:$0xff]
  %v1230 = vld [vmem:[%s5 + $0x18] sm:$0xff]
  %v1232 = vsel %vm125, %v1226, 0
  %1234 = vmatpush.msra.mxu0 0.0
  %1235 = vmatpush.msra.mxu0 0.0
  %1236 = vmatpush.msra.mxu0 0.0
  %1237 = vmatpush.msra.mxu0 0.0
  %1238 = vmatpush.msra.mxu0 0.0
  %1239 = vmatpush.msra.mxu0 0.0
  %1240 = vmatpush.msra.mxu0 0.0
  %1241 = vmatpush.msra.mxu0 0.0
  %1242 = vmatpush.msra.mxu0 0.0
  %1243 = vmatpush.msra.mxu0 0.0
  %1244 = vmatpush.msra.mxu0 0.0
  %1245 = vmatpush.msra.mxu0 0.0
  %1246 = vmatpush.msra.mxu0 %v1230
  %1247 = vmatpush.msra.mxu0 %v1229
  %1248 = vmatpush.msra.mxu0 %v1228
  %1249 = vmatpush.msra.mxu0 %v1227
  %1250 = vmatmul.f32.gmra.mxu0 %v1232
  %v1251 = vpop.f32.mrf.mxu0
  %v1252 = vadd.f32 0.0, %v1251
  %1253 = vdwg.mxu0
  %v1254 = vadd.f32 %v1225, %v1252
  %v1255 = vxor.u32 %v1254, 2147483648
  %v1256 = vmul.f32 %v1255, 1.442695
  %v1257 = vpow.pop %v1256
  %v1258 = vadd.f32 %v1257, 1.0
  %v1259 = vrcp.pop %v1258
  %v1260 = vmul.f32 %v1258, %v1259
  %v1261 = vsub.f32 1.0, %v1260
  %v1262 = vmul.f32 %v1259, %v1261
  %v1263 = vadd.f32 %v1259, %v1262
  %vm1264 = vweird.f32 %v1258
  %vm1265 = vweird.f32 %v1259
  %vm1266 = vmor %vm1264, %vm1265
  %v1267 = vsel %vm1266, %v1259, %v1263
  %v1268 = vand.u32 2147483647, %v1258
  %vm1269 = vcmp.eq.f32.partialorder %v1268, 8.507059e+37
  %v1270 = vand.u32 %v1258, 2147483648
  %v1271 = vor.u32 1.1754944e-38, %v1270
  %v1272 = vsel %vm1269, %v1271, %v1267
  %v1273 = vmul.f32 1.0, %v1272
  %v1274 = vtanh.pop %v1254
  %v1275 = vld [vmem:[#allocation5] sm:$0xff]
  %1277 = vrot.lane.b32.xlu0 %v1275, 32
  %v1278 = vpop.permute.xlu0 %1277
  %v1280 = vmul.f32 %v1273, %v1278
  %1282 = vrot.lane.b32.xlu0 %v1274, 64
  %v1283 = vpop.permute.xlu0 %1282
  %v1285 = vmul.f32 %v1273, %v1283
  %1287 = vrot.lane.b32.xlu0 %v1285, 32
  %v1288 = vpop.permute.xlu0 %1287
  %v1290 = vadd.f32 %v1280, %v1288
  %v1291 = vtanh.pop %v1290
  %1293 = vrot.lane.b32.xlu0 %v1291, 64
  %v1294 = vpop.permute.xlu0 %1293
  %v1296 = vmul.f32 %v1273, %v1294
  %1298 = vrot.lane.b32.xlu0 %v1290, 96
  %v1299 = vpop.permute.xlu0 %1298
  %1301 = vst.msk [vmem:[#allocation5] sm:$0xff] %vm125, %v1299
  %1303 = vrot.lane.b32.xlu0 %v1296, 32
  %v1304 = vpop.permute.xlu0 %1303
  %1306 = vst.msk [vmem:[#allocation4] sm:$0xff] %vm125, %v1304
  %v1307 = vld [vmem:[%s551] sm:$0xff]
  %v1308 = vld [vmem:[#allocation4] sm:$0xff]
  %v1309 = vld [vmem:[%s5] sm:$0xff]
  %v1310 = vld [vmem:[%s5 + $0x8] sm:$0xff]
  %v1311 = vld [vmem:[%s5 + $0x10] sm:$0xff]
  %v1312 = vld [vmem:[%s5 + $0x18] sm:$0xff]
  %v1314 = vsel %vm125, %v1308, 0
  %1316 = vmatpush.msra.mxu0 0.0
  %1317 = vmatpush.msra.mxu0 0.0
  %1318 = vmatpush.msra.mxu0 0.0
  %1319 = vmatpush.msra.mxu0 0.0
  %1320 = vmatpush.msra.mxu0 0.0
  %1321 = vmatpush.msra.mxu0 0.0
  %1322 = vmatpush.msra.mxu0 0.0
  %1323 = vmatpush.msra.mxu0 0.0
  %1324 = vmatpush.msra.mxu0 0.0
  %1325 = vmatpush.msra.mxu0 0.0
  %1326 = vmatpush.msra.mxu0 0.0
  %1327 = vmatpush.msra.mxu0 0.0
  %1328 = vmatpush.msra.mxu0 %v1312
  %1329 = vmatpush.msra.mxu0 %v1311
  %1330 = vmatpush.msra.mxu0 %v1310
  %1331 = vmatpush.msra.mxu0 %v1309
  %1332 = vmatmul.f32.gmra.mxu0 %v1314
  %v1333 = vpop.f32.mrf.mxu0
  %v1334 = vadd.f32 0.0, %v1333
  %1335 = vdwg.mxu0
  %v1336 = vadd.f32 %v1307, %v1334
  %v1337 = vxor.u32 %v1336, 2147483648
  %v1338 = vmul.f32 %v1337, 1.442695
  %v1339 = vpow.pop %v1338
  %v1340 = vadd.f32 %v1339, 1.0
  %v1341 = vrcp.pop %v1340
  %v1342 = vmul.f32 %v1340, %v1341
  %v1343 = vsub.f32 1.0, %v1342
  %v1344 = vmul.f32 %v1341, %v1343
  %v1345 = vadd.f32 %v1341, %v1344
  %vm1346 = vweird.f32 %v1340
  %vm1347 = vweird.f32 %v1341
  %vm1348 = vmor %vm1346, %vm1347
  %v1349 = vsel %vm1348, %v1341, %v1345
  %v1350 = vand.u32 2147483647, %v1340
  %vm1351 = vcmp.eq.f32.partialorder %v1350, 8.507059e+37
  %v1352 = vand.u32 %v1340, 2147483648
  %v1353 = vor.u32 1.1754944e-38, %v1352
  %v1354 = vsel %vm1351, %v1353, %v1349
  %v1355 = vmul.f32 1.0, %v1354
  %v1356 = vtanh.pop %v1336
  %v1357 = vld [vmem:[#allocation5] sm:$0xff]
  %1359 = vrot.lane.b32.xlu0 %v1357, 32
  %v1360 = vpop.permute.xlu0 %1359
  %v1362 = vmul.f32 %v1355, %v1360
  %1364 = vrot.lane.b32.xlu0 %v1356, 64
  %v1365 = vpop.permute.xlu0 %1364
  %v1367 = vmul.f32 %v1355, %v1365
  %1369 = vrot.lane.b32.xlu0 %v1367, 32
  %v1370 = vpop.permute.xlu0 %1369
  %v1372 = vadd.f32 %v1362, %v1370
  %v1373 = vtanh.pop %v1372
  %1375 = vrot.lane.b32.xlu0 %v1373, 64
  %v1376 = vpop.permute.xlu0 %1375
  %v1378 = vmul.f32 %v1355, %v1376
  %1380 = vrot.lane.b32.xlu0 %v1372, 96
  %v1381 = vpop.permute.xlu0 %1380
  %1383 = vst.msk [vmem:[#allocation5] sm:$0xff] %vm125, %v1381
  %1385 = vrot.lane.b32.xlu0 %v1378, 32
  %v1386 = vpop.permute.xlu0 %1385
  %1388 = vst.msk [vmem:[#allocation4] sm:$0xff] %vm125, %v1386
  %v1389 = vld [vmem:[%s636] sm:$0xff]
  %v1390 = vld [vmem:[#allocation4] sm:$0xff]
  %v1391 = vld [vmem:[%s5] sm:$0xff]
  %v1392 = vld [vmem:[%s5 + $0x8] sm:$0xff]
  %v1393 = vld [vmem:[%s5 + $0x10] sm:$0xff]
  %v1394 = vld [vmem:[%s5 + $0x18] sm:$0xff]
  %v1396 = vsel %vm125, %v1390, 0
  %1398 = vmatpush.msra.mxu0 0.0
  %1399 = vmatpush.msra.mxu0 0.0
  %1400 = vmatpush.msra.mxu0 0.0
  %1401 = vmatpush.msra.mxu0 0.0
  %1402 = vmatpush.msra.mxu0 0.0
  %1403 = vmatpush.msra.mxu0 0.0
  %1404 = vmatpush.msra.mxu0 0.0
  %1405 = vmatpush.msra.mxu0 0.0
  %1406 = vmatpush.msra.mxu0 0.0
  %1407 = vmatpush.msra.mxu0 0.0
  %1408 = vmatpush.msra.mxu0 0.0
  %1409 = vmatpush.msra.mxu0 0.0
  %1410 = vmatpush.msra.mxu0 %v1394
  %1411 = vmatpush.msra.mxu0 %v1393
  %1412 = vmatpush.msra.mxu0 %v1392
  %1413 = vmatpush.msra.mxu0 %v1391
  %1414 = vmatmul.f32.gmra.mxu0 %v1396
  %v1415 = vpop.f32.mrf.mxu0
  %v1416 = vadd.f32 0.0, %v1415
  %1417 = vdwg.mxu0
  %v1418 = vadd.f32 %v1389, %v1416
  %v1419 = vxor.u32 %v1418, 2147483648
  %v1420 = vmul.f32 %v1419, 1.442695
  %v1421 = vpow.pop %v1420
  %v1422 = vadd.f32 %v1421, 1.0
  %v1423 = vrcp.pop %v1422
  %v1424 = vmul.f32 %v1422, %v1423
  %v1425 = vsub.f32 1.0, %v1424
  %v1426 = vmul.f32 %v1423, %v1425
  %v1427 = vadd.f32 %v1423, %v1426
  %vm1428 = vweird.f32 %v1422
  %vm1429 = vweird.f32 %v1423
  %vm1430 = vmor %vm1428, %vm1429
  %v1431 = vsel %vm1430, %v1423, %v1427
  %v1432 = vand.u32 2147483647, %v1422
  %vm1433 = vcmp.eq.f32.partialorder %v1432, 8.507059e+37
  %v1434 = vand.u32 %v1422, 2147483648
  %v1435 = vor.u32 1.1754944e-38, %v1434
  %v1436 = vsel %vm1433, %v1435, %v1431
  %v1437 = vmul.f32 1.0, %v1436
  %v1438 = vtanh.pop %v1418
  %v1439 = vld [vmem:[#allocation5] sm:$0xff]
  %1441 = vrot.lane.b32.xlu0 %v1439, 32
  %v1442 = vpop.permute.xlu0 %1441
  %v1444 = vmul.f32 %v1437, %v1442
  %1446 = vrot.lane.b32.xlu0 %v1438, 64
  %v1447 = vpop.permute.xlu0 %1446
  %v1449 = vmul.f32 %v1437, %v1447
  %1451 = vrot.lane.b32.xlu0 %v1449, 32
  %v1452 = vpop.permute.xlu0 %1451
  %v1454 = vadd.f32 %v1444, %v1452
  %v1455 = vtanh.pop %v1454
  %1457 = vrot.lane.b32.xlu0 %v1455, 64
  %v1458 = vpop.permute.xlu0 %1457
  %v1460 = vmul.f32 %v1437, %v1458
  %1462 = vrot.lane.b32.xlu0 %v1454, 96
  %v1463 = vpop.permute.xlu0 %1462
  %1465 = vst.msk [vmem:[#allocation5] sm:$0xff] %vm125, %v1463
  %1467 = vrot.lane.b32.xlu0 %v1460, 32
  %v1468 = vpop.permute.xlu0 %1467
  %1470 = vst.msk [vmem:[#allocation4] sm:$0xff] %vm125, %v1468
  %v1471 = vld [vmem:[%s721] sm:$0xff]
  %v1472 = vld [vmem:[#allocation4] sm:$0xff]
  %v1473 = vld [vmem:[%s5] sm:$0xff]
  %v1474 = vld [vmem:[%s5 + $0x8] sm:$0xff]
  %v1475 = vld [vmem:[%s5 + $0x10] sm:$0xff]
  %v1476 = vld [vmem:[%s5 + $0x18] sm:$0xff]
  %v1478 = vsel %vm125, %v1472, 0
  %1480 = vmatpush.msra.mxu0 0.0
  %1481 = vmatpush.msra.mxu0 0.0
  %1482 = vmatpush.msra.mxu0 0.0
  %1483 = vmatpush.msra.mxu0 0.0
  %1484 = vmatpush.msra.mxu0 0.0
  %1485 = vmatpush.msra.mxu0 0.0
  %1486 = vmatpush.msra.mxu0 0.0
  %1487 = vmatpush.msra.mxu0 0.0
  %1488 = vmatpush.msra.mxu0 0.0
  %1489 = vmatpush.msra.mxu0 0.0
  %1490 = vmatpush.msra.mxu0 0.0
  %1491 = vmatpush.msra.mxu0 0.0
  %1492 = vmatpush.msra.mxu0 %v1476
  %1493 = vmatpush.msra.mxu0 %v1475
  %1494 = vmatpush.msra.mxu0 %v1474
  %1495 = vmatpush.msra.mxu0 %v1473
  %1496 = vmatmul.f32.gmra.mxu0 %v1478
  %v1497 = vpop.f32.mrf.mxu0
  %v1498 = vadd.f32 0.0, %v1497
  %1499 = vdwg.mxu0
  %v1500 = vadd.f32 %v1471, %v1498
  %v1501 = vxor.u32 %v1500, 2147483648
  %v1502 = vmul.f32 %v1501, 1.442695
  %v1503 = vpow.pop %v1502
  %v1504 = vadd.f32 %v1503, 1.0
  %v1505 = vrcp.pop %v1504
  %v1506 = vmul.f32 %v1504, %v1505
  %v1507 = vsub.f32 1.0, %v1506
  %v1508 = vmul.f32 %v1505, %v1507
  %v1509 = vadd.f32 %v1505, %v1508
  %vm1510 = vweird.f32 %v1504
  %vm1511 = vweird.f32 %v1505
  %vm1512 = vmor %vm1510, %vm1511
  %v1513 = vsel %vm1512, %v1505, %v1509
  %v1514 = vand.u32 2147483647, %v1504
  %vm1515 = vcmp.eq.f32.partialorder %v1514, 8.507059e+37
  %v1516 = vand.u32 %v1504, 2147483648
  %v1517 = vor.u32 1.1754944e-38, %v1516
  %v1518 = vsel %vm1515, %v1517, %v1513
  %v1519 = vmul.f32 1.0, %v1518
  %v1520 = vtanh.pop %v1500
  %v1521 = vld [vmem:[#allocation5] sm:$0xff]
  %1523 = vrot.lane.b32.xlu0 %v1521, 32
  %v1524 = vpop.permute.xlu0 %1523
  %v1526 = vmul.f32 %v1519, %v1524
  %1528 = vrot.lane.b32.xlu0 %v1520, 64
  %v1529 = vpop.permute.xlu0 %1528
  %v1531 = vmul.f32 %v1519, %v1529
  %1533 = vrot.lane.b32.xlu0 %v1531, 32
  %v1534 = vpop.permute.xlu0 %1533
  %v1536 = vadd.f32 %v1526, %v1534
  %v1537 = vtanh.pop %v1536
  %1539 = vrot.lane.b32.xlu0 %v1537, 64
  %v1540 = vpop.permute.xlu0 %1539
  %v1542 = vmul.f32 %v1519, %v1540
  %1544 = vrot.lane.b32.xlu0 %v1536, 96
  %v1545 = vpop.permute.xlu0 %1544
  %1547 = vst.msk [vmem:[#allocation5] sm:$0xff] %vm125, %v1545
  %1549 = vrot.lane.b32.xlu0 %v1542, 32
  %v1550 = vpop.permute.xlu0 %1549
  %1552 = vst.msk [vmem:[#allocation4] sm:$0xff] %vm125, %v1550
  %v1553 = vld [vmem:[#allocation4] sm:$0xff]
  %v1554 = vld [vmem:[%s7] sm:$0xff]
  %v1555 = vld [vmem:[%s7 + $0x8] sm:$0xff]
  %v1556 = vld [vmem:[%s7 + $0x10] sm:$0xff]
  %v1557 = vld [vmem:[%s7 + $0x18] sm:$0xff]
  %v1558 = vld [vmem:[#allocation6] sm:$0x1]
  %v1560 = vperm.slane %v1558, 0
  %v1563 = vsel %vm125, %v1553, 0
  %1565 = vmatpush.msra.mxu0 0.0
  %1566 = vmatpush.msra.mxu0 0.0
  %1567 = vmatpush.msra.mxu0 0.0
  %1568 = vmatpush.msra.mxu0 0.0
  %1569 = vmatpush.msra.mxu0 0.0
  %1570 = vmatpush.msra.mxu0 0.0
  %1571 = vmatpush.msra.mxu0 0.0
  %1572 = vmatpush.msra.mxu0 0.0
  %1573 = vmatpush.msra.mxu0 0.0
  %1574 = vmatpush.msra.mxu0 0.0
  %1575 = vmatpush.msra.mxu0 0.0
  %1576 = vmatpush.msra.mxu0 0.0
  %1577 = vmatpush.msra.mxu0 %v1557
  %1578 = vmatpush.msra.mxu0 %v1556
  %1579 = vmatpush.msra.mxu0 %v1555
  %1580 = vmatpush.msra.mxu0 %v1554
  %1581 = vmatmul.f32.gmra.mxu0 %v1563
  %v1582 = vpop.f32.mrf.mxu0
  %v1583 = vadd.f32 %v1560, %v1582
  %1584 = vdwg.mxu0
  %vm1585 = vcmask 7168
  %1586 = vst.msk [vmem:[%s9] sm:$0xff] %vm1585, %v1583
  // Predicated region
  $region38: #{lstm_aqi_forward.1} parent=0 // pred_check
    _
  $region39: #{lstm_aqi_forward.1} parent=0 // pred_check_branch
    %1588 = sbr.rel (0) target = $region41
  $region40: #{lstm_aqi_forward.1} parent=0 // pred_region
    _
  $region41: #{lstm_aqi_forward.1} parent=0 // pred_fallthru
    _
  // Predicated region
  $region42: #{lstm_aqi_forward.1} parent=0 // pred_check
    _
  $region43: #{lstm_aqi_forward.1} parent=0 // pred_check_branch
    %1590 = sbr.rel (0) target = $region45
  $region44: #{lstm_aqi_forward.1} parent=0 // pred_region
    _
  $region45: #{lstm_aqi_forward.1} parent=0 // pred_fallthru
    _

</llo_original>
